<compile_context>
chip_gen: v7x
topology: tpu7x:2x2x1
jax: 0.10.0
libtpu: 0.0.40
codegen_flags: <defaults>
</compile_context>

<pallas_src>
import math

import jax
import jax.numpy as jnp
import numpy as np
from jax.experimental import pallas as pl
from jax.experimental.pallas import tpu as pltpu


def deconv_kernel(x_ref, w_ref, b_ref, out_ref, col_ref):
    # x_ref:   (1, H+2, W+2, Cin) f32   one example, spatially zero-padded NHWC
    # w_ref:   (K*K*Cin, CP)      bf16  flipped deconv weights as a matmul matrix
    # b_ref:   (1, CP)            f32   bias (Cout zero-padded to CP)
    # out_ref: (1, H*W, CP)       f32   per-example output slab
    # col_ref: (H*W, K*K*Cin)     f32   im2col scratch (VMEM)
    _, Hp, Wp, Cin = x_ref.shape
    KKC, _ = w_ref.shape
    K = math.isqrt(KKC // Cin)
    H, W = Hp - K + 1, Wp - K + 1
    HW = H * W

    # Build the im2col slab once: K*K shifted-window copies with static offsets.
    for kh in range(K):
        for kw in range(K):
            t = kh * K + kw
            col_ref[:, t * Cin:(t + 1) * Cin] = (
                x_ref[0, kh:kh + H, kw:kw + W, :].reshape(HW, Cin))

    # One MXU matmul over the full 576-deep contraction, bf16 in / f32 accumulate.
    acc = jnp.dot(col_ref[...].astype(jnp.bfloat16), w_ref[...],
                  preferred_element_type=jnp.float32)
    out_ref[0] = acc + b_ref[...]


def cifar10_decoder_conv1(x_nchw, w_deconv, b_deconv):
    """ConvTranspose2d(64, 3, kernel_size=3, stride=1, padding=1) forward.

    x_nchw:   (N, 64, H, W)  float32
    w_deconv: (64, 3, 3, 3)  PyTorch ConvTranspose2d weight layout (Cin, Cout, K, K)
    b_deconv: (3,)           bias
    returns:  (N, 3, H, W)   NCHW, matching the PyTorch module
    """
    N, Cin, H, W = x_nchw.shape
    Cin_w, Cout, K, _ = w_deconv.shape
    assert Cin == Cin_w
    P = 1                 # ConvTranspose2d padding
    PP = K - 1 - P        # equivalent correlation padding (= 1)
    CP = 8                # pad output channels 3 -> 8 (one sublane), not 128

    # NCHW -> NHWC (channels on lanes) + spatial zero-pad for the VALID correlation.
    x = jnp.transpose(x_nchw, (0, 2, 3, 1)).astype(jnp.float32)
    x = jnp.pad(x, ((0, 0), (PP, PP), (PP, PP), (0, 0)))

    # ConvTranspose2d(stride=1) == correlation with the spatially flipped kernel
    # and in/out channels swapped:  w_hwio[kh,kw,ci,co] = W[ci,co,K-1-kh,K-1-kw].
    # Flatten to a (K*K*Cin, Cout) matmul weight matching the im2col column order
    # (tap-major, channel-minor), then pad Cout 3 -> 8.
    w = jnp.transpose(w_deconv[:, :, ::-1, ::-1], (2, 3, 0, 1))      # (K,K,Cin,Cout)
    w = w.reshape(K * K * Cin, Cout).astype(jnp.bfloat16)
    w = jnp.pad(w, ((0, 0), (0, CP - Cout)))
    b = jnp.pad(b_deconv.reshape(1, Cout).astype(jnp.float32),
                ((0, 0), (0, CP - Cout)))

    Ho = H + 2 * PP - K + 1          # == H for K=3, P=1
    Wo = W + 2 * PP - K + 1          # == W
    HW = Ho * Wo

    out3d = pl.pallas_call(
        deconv_kernel,
        out_shape=jax.ShapeDtypeStruct((N, HW, CP), jnp.float32),
        grid=(N,),
        in_specs=[
            pl.BlockSpec((1,) + x.shape[1:], lambda n: (n, 0, 0, 0)),
            pl.BlockSpec(w.shape, lambda n: (0, 0)),
            pl.BlockSpec(b.shape, lambda n: (0, 0)),
        ],
        out_specs=pl.BlockSpec((1, HW, CP), lambda n: (n, 0, 0)),
        scratch_shapes=[pltpu.VMEM((HW, K * K * Cin), jnp.float32)],
        compiler_params=pltpu.CompilerParams(
            dimension_semantics=("parallel",),
            vmem_limit_bytes=32 * 1024 * 1024),
    )(x, w, b)

    # Drop channel padding, restore (N, H, W, Cout), NHWC -> NCHW (tiny tensors).
    out = out3d[:, :, :Cout].reshape(N, Ho, Wo, Cout)
    return jnp.transpose(out, (0, 3, 1, 2))


def reference_forward_np(x, w, b):
    """Independent numpy reference using the scatter definition of ConvTranspose2d.

    x: (N, Cin, H, W), w: (Cin, Cout, K, K), b: (Cout,); stride=1, padding=1.
    """
    N, Cin, H, W = x.shape
    _, Cout, K, _ = w.shape
    p = 1
    Ho, Wo = (H - 1) - 2 * p + K, (W - 1) - 2 * p + K
    y = np.zeros((N, Cout, H + 2 * p, W + 2 * p), np.float32)
    for kh in range(K):
        for kw in range(K):
            y[:, :, kh:kh + H, kw:kw + W] += np.einsum(
                'nchw,cd->ndhw', x, w[:, :, kh, kw]).astype(np.float32)
    y = y[:, :, p:p + Ho, p:p + Wo]
    return y + b.reshape(1, -1, 1, 1)


if __name__ == "__main__":
    # Shapes consistent with the module: in_channels=64 is fixed by the deconv;
    # batch=2, 16x16 spatial.  Output: (2, 3, 16, 16).
    N, Cin, H, W = 2, 64, 16, 16
    Cout, K = 3, 3

    key = jax.random.PRNGKey(0)
    kx, kwgt, kb = jax.random.split(key, 3)
    x = jax.random.normal(kx, (N, Cin, H, W), dtype=jnp.float32)
    w = jax.random.normal(kwgt, (Cin, Cout, K, K), dtype=jnp.float32) * 0.1
    b = jax.random.normal(kb, (Cout,), dtype=jnp.float32) * 0.01

    out = jax.block_until_ready(cifar10_decoder_conv1(x, w, b))
    ref = reference_forward_np(np.asarray(x), np.asarray(w), np.asarray(b))

    assert out.shape == (N, Cout, H, W), out.shape
    # bf16 MXU operands (f32 accumulate) -> loosened tolerance vs. exact f32.
    np.testing.assert_allclose(np.asarray(out), ref, rtol=2e-2, atol=2e-2)
    print("KERNEL_OK")
</pallas_src>

<mosaic_0001>
module attributes {stable_mosaic.version = 11 : i64} {
  func.func @deconv_kernel(%arg0: i32, %arg1: memref<1x18x18x64xf32, #tpu.memory_space<vmem>>, %arg2: memref<576x8xbf16, #tpu.memory_space<vmem>>, %arg3: memref<1x8xf32, #tpu.memory_space<vmem>>, %arg4: memref<1x256x8xf32, #tpu.memory_space<vmem>>, %arg5: memref<256x576xf32, #tpu.memory_space<vmem>>) attributes {dimension_semantics = [#tpu.dimension_semantics<parallel>], iteration_bounds = array<i64: 2>, scalar_prefetch = 0 : i64, scratch_operands = 1 : i64, tpu.core_type = #tpu.core_type<tc>, window_params = [{transform_indices = @transform_0, window_bounds = array<i64: 1, 18, 18, 64>}, {pipeline_mode = #tpu.pipeline_mode<synchronous>, transform_indices = @transform_1, window_bounds = array<i64: 576, 8>}, {pipeline_mode = #tpu.pipeline_mode<synchronous>, transform_indices = @transform_2, window_bounds = array<i64: 1, 8>}, {transform_indices = @transform_3, window_bounds = array<i64: 1, 256, 8>}]} {
    %c0 = arith.constant 0 : index
    %c0_0 = arith.constant 0 : index
    %c0_1 = arith.constant 0 : index
    %c0_2 = arith.constant 0 : index
    %0 = vector.load %arg1[%c0, %c0_0, %c0_1, %c0_2] : memref<1x18x18x64xf32, #tpu.memory_space<vmem>>, vector<1x16x16x64xf32>
    %1 = vector.shape_cast %0 : vector<1x16x16x64xf32> to vector<16x16x64xf32>
    %2 = vector.shape_cast %1 : vector<16x16x64xf32> to vector<256x64xf32>
    %c0_3 = arith.constant 0 : index
    %c0_4 = arith.constant 0 : index
    %3 = vector.load %arg5[%c0_3, %c0_4] : memref<256x576xf32, #tpu.memory_space<vmem>>, vector<256x64xf32>
    tpu.vector_store %arg5[%c0_3, %c0_4], %2 {strides = array<i32>} : memref<256x576xf32, #tpu.memory_space<vmem>>, vector<256x64xf32>,
    %c0_5 = arith.constant 0 : index
    %c0_6 = arith.constant 0 : index
    %c1 = arith.constant 1 : index
    %c0_7 = arith.constant 0 : index
    %4 = vector.load %arg1[%c0_5, %c0_6, %c1, %c0_7] : memref<1x18x18x64xf32, #tpu.memory_space<vmem>>, vector<1x16x16x64xf32>
    %5 = vector.shape_cast %4 : vector<1x16x16x64xf32> to vector<16x16x64xf32>
    %6 = vector.shape_cast %5 : vector<16x16x64xf32> to vector<256x64xf32>
    %c0_8 = arith.constant 0 : index
    %c64 = arith.constant 64 : index
    %7 = vector.load %arg5[%c0_8, %c64] : memref<256x576xf32, #tpu.memory_space<vmem>>, vector<256x64xf32>
    tpu.vector_store %arg5[%c0_8, %c64], %6 {strides = array<i32>} : memref<256x576xf32, #tpu.memory_space<vmem>>, vector<256x64xf32>,
    %c0_9 = arith.constant 0 : index
    %c0_10 = arith.constant 0 : index
    %c2 = arith.constant 2 : index
    %c0_11 = arith.constant 0 : index
    %8 = vector.load %arg1[%c0_9, %c0_10, %c2, %c0_11] : memref<1x18x18x64xf32, #tpu.memory_space<vmem>>, vector<1x16x16x64xf32>
    %9 = vector.shape_cast %8 : vector<1x16x16x64xf32> to vector<16x16x64xf32>
    %10 = vector.shape_cast %9 : vector<16x16x64xf32> to vector<256x64xf32>
    %c0_12 = arith.constant 0 : index
    %c128 = arith.constant 128 : index
    %11 = vector.load %arg5[%c0_12, %c128] : memref<256x576xf32, #tpu.memory_space<vmem>>, vector<256x64xf32>
    tpu.vector_store %arg5[%c0_12, %c128], %10 {strides = array<i32>} : memref<256x576xf32, #tpu.memory_space<vmem>>, vector<256x64xf32>,
    %c0_13 = arith.constant 0 : index
    %c1_14 = arith.constant 1 : index
    %c0_15 = arith.constant 0 : index
    %c0_16 = arith.constant 0 : index
    %12 = vector.load %arg1[%c0_13, %c1_14, %c0_15, %c0_16] : memref<1x18x18x64xf32, #tpu.memory_space<vmem>>, vector<1x16x16x64xf32>
    %13 = vector.shape_cast %12 : vector<1x16x16x64xf32> to vector<16x16x64xf32>
    %14 = vector.shape_cast %13 : vector<16x16x64xf32> to vector<256x64xf32>
    %c0_17 = arith.constant 0 : index
    %c192 = arith.constant 192 : index
    %15 = vector.load %arg5[%c0_17, %c192] : memref<256x576xf32, #tpu.memory_space<vmem>>, vector<256x64xf32>
    tpu.vector_store %arg5[%c0_17, %c192], %14 {strides = array<i32>} : memref<256x576xf32, #tpu.memory_space<vmem>>, vector<256x64xf32>,
    %c0_18 = arith.constant 0 : index
    %c1_19 = arith.constant 1 : index
    %c1_20 = arith.constant 1 : index
    %c0_21 = arith.constant 0 : index
    %16 = vector.load %arg1[%c0_18, %c1_19, %c1_20, %c0_21] : memref<1x18x18x64xf32, #tpu.memory_space<vmem>>, vector<1x16x16x64xf32>
    %17 = vector.shape_cast %16 : vector<1x16x16x64xf32> to vector<16x16x64xf32>
    %18 = vector.shape_cast %17 : vector<16x16x64xf32> to vector<256x64xf32>
    %c0_22 = arith.constant 0 : index
    %c256 = arith.constant 256 : index
    %19 = vector.load %arg5[%c0_22, %c256] : memref<256x576xf32, #tpu.memory_space<vmem>>, vector<256x64xf32>
    tpu.vector_store %arg5[%c0_22, %c256], %18 {strides = array<i32>} : memref<256x576xf32, #tpu.memory_space<vmem>>, vector<256x64xf32>,
    %c0_23 = arith.constant 0 : index
    %c1_24 = arith.constant 1 : index
    %c2_25 = arith.constant 2 : index
    %c0_26 = arith.constant 0 : index
    %20 = vector.load %arg1[%c0_23, %c1_24, %c2_25, %c0_26] : memref<1x18x18x64xf32, #tpu.memory_space<vmem>>, vector<1x16x16x64xf32>
    %21 = vector.shape_cast %20 : vector<1x16x16x64xf32> to vector<16x16x64xf32>
    %22 = vector.shape_cast %21 : vector<16x16x64xf32> to vector<256x64xf32>
    %c0_27 = arith.constant 0 : index
    %c320 = arith.constant 320 : index
    %23 = vector.load %arg5[%c0_27, %c320] : memref<256x576xf32, #tpu.memory_space<vmem>>, vector<256x64xf32>
    tpu.vector_store %arg5[%c0_27, %c320], %22 {strides = array<i32>} : memref<256x576xf32, #tpu.memory_space<vmem>>, vector<256x64xf32>,
    %c0_28 = arith.constant 0 : index
    %c2_29 = arith.constant 2 : index
    %c0_30 = arith.constant 0 : index
    %c0_31 = arith.constant 0 : index
    %24 = vector.load %arg1[%c0_28, %c2_29, %c0_30, %c0_31] : memref<1x18x18x64xf32, #tpu.memory_space<vmem>>, vector<1x16x16x64xf32>
    %25 = vector.shape_cast %24 : vector<1x16x16x64xf32> to vector<16x16x64xf32>
    %26 = vector.shape_cast %25 : vector<16x16x64xf32> to vector<256x64xf32>
    %c0_32 = arith.constant 0 : index
    %c384 = arith.constant 384 : index
    %27 = vector.load %arg5[%c0_32, %c384] : memref<256x576xf32, #tpu.memory_space<vmem>>, vector<256x64xf32>
    tpu.vector_store %arg5[%c0_32, %c384], %26 {strides = array<i32>} : memref<256x576xf32, #tpu.memory_space<vmem>>, vector<256x64xf32>,
    %c0_33 = arith.constant 0 : index
    %c2_34 = arith.constant 2 : index
    %c1_35 = arith.constant 1 : index
    %c0_36 = arith.constant 0 : index
    %28 = vector.load %arg1[%c0_33, %c2_34, %c1_35, %c0_36] : memref<1x18x18x64xf32, #tpu.memory_space<vmem>>, vector<1x16x16x64xf32>
    %29 = vector.shape_cast %28 : vector<1x16x16x64xf32> to vector<16x16x64xf32>
    %30 = vector.shape_cast %29 : vector<16x16x64xf32> to vector<256x64xf32>
    %c0_37 = arith.constant 0 : index
    %c448 = arith.constant 448 : index
    %31 = vector.load %arg5[%c0_37, %c448] : memref<256x576xf32, #tpu.memory_space<vmem>>, vector<256x64xf32>
    tpu.vector_store %arg5[%c0_37, %c448], %30 {strides = array<i32>} : memref<256x576xf32, #tpu.memory_space<vmem>>, vector<256x64xf32>,
    %c0_38 = arith.constant 0 : index
    %c2_39 = arith.constant 2 : index
    %c2_40 = arith.constant 2 : index
    %c0_41 = arith.constant 0 : index
    %32 = vector.load %arg1[%c0_38, %c2_39, %c2_40, %c0_41] : memref<1x18x18x64xf32, #tpu.memory_space<vmem>>, vector<1x16x16x64xf32>
    %33 = vector.shape_cast %32 : vector<1x16x16x64xf32> to vector<16x16x64xf32>
    %34 = vector.shape_cast %33 : vector<16x16x64xf32> to vector<256x64xf32>
    %c0_42 = arith.constant 0 : index
    %c512 = arith.constant 512 : index
    %35 = vector.load %arg5[%c0_42, %c512] : memref<256x576xf32, #tpu.memory_space<vmem>>, vector<256x64xf32>
    tpu.vector_store %arg5[%c0_42, %c512], %34 {strides = array<i32>} : memref<256x576xf32, #tpu.memory_space<vmem>>, vector<256x64xf32>,
    %c0_43 = arith.constant 0 : index
    %c0_44 = arith.constant 0 : index
    %36 = vector.load %arg5[%c0_43, %c0_44] : memref<256x576xf32, #tpu.memory_space<vmem>>, vector<256x576xf32>
    %37 = arith.truncf %36 : vector<256x576xf32> to vector<256x576xbf16>
    %c0_45 = arith.constant 0 : index
    %c0_46 = arith.constant 0 : index
    %38 = vector.load %arg2[%c0_45, %c0_46] : memref<576x8xbf16, #tpu.memory_space<vmem>>, vector<576x8xbf16>
    %cst = arith.constant dense<0.000000e+00> : vector<256x8xf32>
    %39 = tpu.matmul %37, %38, %cst {dimension_numbers = #tpu.dot_dimension_numbers<[1], [0], [0], [1], [0, 0, 1, 1], [], []>} : vector<256x576xbf16>, vector<576x8xbf16>, vector<256x8xf32> -> vector<256x8xf32>
    %c0_47 = arith.constant 0 : index
    %c0_48 = arith.constant 0 : index
    %40 = vector.load %arg3[%c0_47, %c0_48] : memref<1x8xf32, #tpu.memory_space<vmem>>, vector<1x8xf32>
    %41 = vector.broadcast %40 : vector<1x8xf32> to vector<256x8xf32>
    %42 = arith.addf %39, %41 : vector<256x8xf32>
    %c0_49 = arith.constant 0 : index
    %c0_50 = arith.constant 0 : index
    %c0_51 = arith.constant 0 : index
    %43 = vector.load %arg4[%c0_49, %c0_50, %c0_51] : memref<1x256x8xf32, #tpu.memory_space<vmem>>, vector<1x256x8xf32>
    %44 = vector.shape_cast %43 : vector<1x256x8xf32> to vector<256x8xf32>
    %45 = vector.shape_cast %42 : vector<256x8xf32> to vector<1x256x8xf32>
    tpu.vector_store %arg4[%c0_49, %c0_50, %c0_51], %45 {strides = array<i32>} : memref<1x256x8xf32, #tpu.memory_space<vmem>>, vector<1x256x8xf32>,
    return
  }
  func.func @transform_0(%arg0: i32) -> (i32, i32, i32, i32) {
    %c0_i32 = arith.constant 0 : i32
    %c0_i32_0 = arith.constant 0 : i32
    %c0_i32_1 = arith.constant 0 : i32
    %c0_i32_2 = arith.constant 0 : i32
    return %arg0, %c0_i32, %c0_i32_0, %c0_i32_1 : i32, i32, i32, i32
  }
  func.func @transform_1(%arg0: i32) -> (i32, i32) {
    %c0_i32 = arith.constant 0 : i32
    %c0_i32_0 = arith.constant 0 : i32
    %c0_i32_1 = arith.constant 0 : i32
    return %c0_i32, %c0_i32_0 : i32, i32
  }
  func.func @transform_2(%arg0: i32) -> (i32, i32) {
    %c0_i32 = arith.constant 0 : i32
    %c0_i32_0 = arith.constant 0 : i32
    %c0_i32_1 = arith.constant 0 : i32
    return %c0_i32, %c0_i32_0 : i32, i32
  }
  func.func @transform_3(%arg0: i32) -> (i32, i32, i32) {
    %c0_i32 = arith.constant 0 : i32
    %c0_i32_0 = arith.constant 0 : i32
    %c0_i32_1 = arith.constant 0 : i32
    return %arg0, %c0_i32, %c0_i32_0 : i32, i32, i32
  }
}

</mosaic_0001>

<llo_original>
// kernel: tpu_custom_call.1
$region0: #{tpu_custom_call.1}
  #allocation0 [shape = 'u32[]', space=smem, size = 0x4, offset = 0x4, fixed_abs, tag = 'smem constant byte address 0x4 - core index']
  #allocation1 [shape = 'u32[144,128]{1,0:T(1,128)}', space=vmem, size = 0x12000, scoped, tag = 'internal scratch']
  #allocation2 [shape = 'f32[256,576]{1,0:T(8,128)}', space=vmem, size = 0xa0000, scoped, tag = 'scratch operand']
  %s0 = inlined_call_operand.vmem [shape: f32[2,18,18,64], index: 0, kind: input, shape index: {}]
  %s1 = inlined_call_operand.vmem [shape: bf16[576,8], index: 1, kind: input, shape index: {}]
  %s2 = inlined_call_operand.vmem [shape: f32[1,8], index: 2, kind: input, shape index: {}]
  %s3 = inlined_call_operand.vmem [shape: f32[2,256,8], index: 3, kind: output, shape index: {}]
  %s4 = sld [smem:[#allocation0]]
  $region45: #{tpu_custom_call.1} parent=0
    _
  %s6 = ssub.s32 1, %s4
  %s7 = scalar_select 0, %s6, %s4
  loop: start=0, step=1, limit=4
  $region2: #{tpu_custom_call.1} parent=0 // loop_pre_header
    _
  $region3: #{tpu_custom_call.1} parent=0 // loop_header
    %s9 = sphi 0, %s13
    %p10 = scmp.ge.s32.totalorder %s9, 4
    %s19 = sphi 0, %s21
    %s22 = sphi 0, %s19
    %s23 = sphi 0, %s22
    %s39 = sphi 0, %s23
    %s43 = sphi 0, %s43
    %s45 = sphi 0, %s43
    %s46 = sphi 0, %s45
    %s60 = sphi 0, %s46
    %s64 = sphi 0, %s64
    %s66 = sphi 0, %s64
    %s67 = sphi 0, %s66
    %s81 = sphi 0, %s67
    %s87 = sphi 0, %s89
    %s90 = sphi 0, %s87
    %s91 = sphi 0, %s90
    %s107 = sphi 0, %s91
  $region4: #{tpu_custom_call.1} parent=0 // loop_header_branch
    %12 = sbr.rel (%p10) target = $region8
  $region5: #{tpu_custom_call.1} parent=0 // loop_body
    %s14 = ssub.s32 %s9, 1
    %s15 = ssub.s32 %s9, 2
    %s16 = sadd.s32 %s9, 1
    %s17 = ssub.s32 %s9, %s16
    %p18 = scmp.eq.s32.totalorder %s17, 0
    %s20 = sadd.s32 %s19, 1
    %s21 = scalar_select %p18, %s19, %s20
    %p24 = pneg %p18
    %p25 = scmp.eq.s32.totalorder %s9, 1
    %p26 = por %p24, %p25
    %p27 = scmp.ne.s32.totalorder %s19, %s22
    %p28 = scmp.eq.s32.totalorder %s9, 0
    %p29 = por %p27, %p28
    %p30 = scmp.ne.s32.totalorder %s19, %s22
    %p31 = scmp.eq.s32.totalorder %s14, 1
    %p32 = por %p30, %p31
    %p33 = scmp.ne.s32.totalorder %s22, %s23
    %p34 = scmp.eq.s32.totalorder %s14, 0
    %p35 = por %p33, %p34
    %p36 = scmp.ne.s32.totalorder %s22, %s23
    %p37 = scmp.eq.s32.totalorder %s15, 1
    %p38 = por %p36, %p37
    %p40 = scmp.ne.s32.totalorder %s23, %s39
    %p41 = scmp.eq.s32.totalorder %s15, 0
    %p42 = por %p40, %p41
    %s44 = sadd.s32 %s43, 1
    %p47 = scmp.eq.s32.totalorder %s9, 1
    %p48 = scmp.ne.s32.totalorder %s43, %s45
    %p49 = scmp.eq.s32.totalorder %s9, 0
    %p50 = por %p48, %p49
    %p51 = scmp.ne.s32.totalorder %s43, %s45
    %p52 = scmp.eq.s32.totalorder %s14, 1
    %p53 = por %p51, %p52
    %p54 = scmp.ne.s32.totalorder %s45, %s46
    %p55 = scmp.eq.s32.totalorder %s14, 0
    %p56 = por %p54, %p55
    %p57 = scmp.ne.s32.totalorder %s45, %s46
    %p58 = scmp.eq.s32.totalorder %s15, 1
    %p59 = por %p57, %p58
    %p61 = scmp.ne.s32.totalorder %s46, %s60
    %p62 = scmp.eq.s32.totalorder %s15, 0
    %p63 = por %p61, %p62
    %s65 = sadd.s32 %s64, 1
    %p68 = scmp.eq.s32.totalorder %s9, 1
    %p69 = scmp.ne.s32.totalorder %s64, %s66
    %p70 = scmp.eq.s32.totalorder %s9, 0
    %p71 = por %p69, %p70
    %p72 = scmp.ne.s32.totalorder %s64, %s66
    %p73 = scmp.eq.s32.totalorder %s14, 1
    %p74 = por %p72, %p73
    %p75 = scmp.ne.s32.totalorder %s66, %s67
    %p76 = scmp.eq.s32.totalorder %s14, 0
    %p77 = por %p75, %p76
    %p78 = scmp.ne.s32.totalorder %s66, %s67
    %p79 = scmp.eq.s32.totalorder %s15, 1
    %p80 = por %p78, %p79
    %p82 = scmp.ne.s32.totalorder %s67, %s81
    %p83 = scmp.eq.s32.totalorder %s15, 0
    %p84 = por %p82, %p83
    %s85 = ssub.s32 %s9, %s16
    %p86 = scmp.eq.s32.totalorder %s85, 0
    %s88 = sadd.s32 %s87, 1
    %s89 = scalar_select %p86, %s87, %s88
    %p92 = pneg %p86
    %p93 = scmp.eq.s32.totalorder %s9, 1
    %p94 = por %p92, %p93
    %p95 = scmp.ne.s32.totalorder %s87, %s90
    %p96 = scmp.eq.s32.totalorder %s9, 0
    %p97 = por %p95, %p96
    %p98 = scmp.ne.s32.totalorder %s87, %s90
    %p99 = scmp.eq.s32.totalorder %s14, 1
    %p100 = por %p98, %p99
    %p101 = scmp.ne.s32.totalorder %s90, %s91
    %p102 = scmp.eq.s32.totalorder %s14, 0
    %p103 = por %p101, %p102
    %p104 = scmp.ne.s32.totalorder %s90, %s91
    %p105 = scmp.eq.s32.totalorder %s15, 1
    %p106 = por %p104, %p105
    %p108 = scmp.ne.s32.totalorder %s91, %s107
    %p109 = scmp.eq.s32.totalorder %s15, 0
    %p110 = por %p108, %p109
    %p111 = scmp.le.s32.totalorder 1, %s9
    %p112 = scmp.lt.s32.totalorder %s9, 3
    %p113 = pnand %p111, %p112
    %p114 = pneg %p113
    // Predicated region
    $region9: #{tpu_custom_call.1} parent=5 // pred_check
      _
    $region10: #{tpu_custom_call.1} parent=5 // pred_check_branch
      %116 = sbr.rel (%p113) target = $region12
    $region11: #{tpu_custom_call.1} parent=5 // pred_region
      %s117 = ssub.s32 %s9, 1
      // Predicated region
      $region13: #{tpu_custom_call.1} parent=11 // pred_check
        %p118 = pneg %p56
      $region14: #{tpu_custom_call.1} parent=11 // pred_check_branch
        %120 = sbr.rel (%p118) target = $region16
      $region15: #{tpu_custom_call.1} parent=11 // pred_region
        _
      $region16: #{tpu_custom_call.1} parent=11 // pred_fallthru
        _
      // Predicated region
      $region17: #{tpu_custom_call.1} parent=11 // pred_check
        %p121 = pneg %p77
      $region18: #{tpu_custom_call.1} parent=11 // pred_check_branch
        %123 = sbr.rel (%p121) target = $region20
      $region19: #{tpu_custom_call.1} parent=11 // pred_region
        _
      $region20: #{tpu_custom_call.1} parent=11 // pred_fallthru
        _
    $region12: #{tpu_custom_call.1} parent=5 // pred_fallthru
      _
    %p124 = scmp.lt.s32.totalorder %s9, 2
    // Predicated region
    $region21: #{tpu_custom_call.1} parent=5 // pred_check
      %p125 = pneg %p124
    $region22: #{tpu_custom_call.1} parent=5 // pred_check_branch
      %127 = sbr.rel (%p125) target = $region24
    $region23: #{tpu_custom_call.1} parent=5 // pred_region
      // Predicated region
      $region25: #{tpu_custom_call.1} parent=23 // pred_check
        %p128 = pneg %p29
      $region26: #{tpu_custom_call.1} parent=23 // pred_check_branch
        %130 = sbr.rel (%p128) target = $region28
      $region27: #{tpu_custom_call.1} parent=23 // pred_region
        %p131 = scmp.lt.s32.totalorder %s9, 1
        %s132 = scalar_select %p131, %s9, 1
        %s133 = smul.addr %s132, 54
        %s134 = smul.addr %s133, 8
        %s135 = scalar_lea.vmem %s0, %s134
      $region28: #{tpu_custom_call.1} parent=23 // pred_fallthru
        _
    $region24: #{tpu_custom_call.1} parent=5 // pred_fallthru
      _
    %p136 = scmp.le.s32.totalorder 1, %s9
    %p137 = scmp.lt.s32.totalorder %s9, 3
    %p138 = pnand %p136, %p137
    %p139 = pneg %p138
    // Predicated region
    $region29: #{tpu_custom_call.1} parent=5 // pred_check
      _
    $region30: #{tpu_custom_call.1} parent=5 // pred_check_branch
      %141 = sbr.rel (%p138) target = $region32
    $region31: #{tpu_custom_call.1} parent=5 // pred_region
      %s142 = ssub.s32 %s9, 1
      %p143 = scmp.lt.s32.totalorder %s14, 1
      %s144 = scalar_select %p143, %s14, 1
      %s145 = smul.addr %s144, 54
      %s146 = smul.addr %s145, 8
      %s147 = scalar_lea.vmem %s0, %s146
      %p148 = pneg %p35
      %p149 = pneg %p32
      %p150 = pneg %p56
      %p151 = pneg %p53
      %p152 = pneg %p77
      %p153 = pneg %p74
      %p154 = pneg %p103
      %p155 = pneg %p100
      %p156 = scmp.lt.s32.totalorder %s14, 1
      %s157 = scalar_select %p156, %s14, 1
      %s158 = smul.addr %s157, 32
      %s159 = smul.addr %s158, 8
      %s160 = scalar_lea.vmem %s3, %s159
      %p161 = scmp.lt.s32.totalorder %s14, 1
      %s162 = scalar_select %p161, %s14, 1
      %s163 = smul.addr %s162, 54
      %s164 = smul.addr %s163, 8
      %s165 = scalar_lea.vmem %s0, %s164
      %p166 = scmp.lt.s32.totalorder %s14, 1
      %s167 = scalar_select %p166, %s14, 1
      %s168 = smul.addr %s167, 32
      %s169 = smul.addr %s168, 8
      %s170 = scalar_lea.vmem %s3, %s169
      %v172 = vld [vmem:[%s165] sm:$0xff]
      %v173 = vld [vmem:[%s165 + $0x8] sm:$0xff]
      %v174 = vld [vmem:[%s165 + $0x18] sm:$0xff]
      %v175 = vld [vmem:[%s165 + $0x20] sm:$0xff]
      %v176 = vld [vmem:[%s165 + $0x30] sm:$0xff]
      %v177 = vld [vmem:[%s165 + $0x38] sm:$0xff]
      %v178 = vld [vmem:[%s165 + $0x48] sm:$0xff]
      %v179 = vld [vmem:[%s165 + $0x50] sm:$0xff]
      %v180 = vld [vmem:[%s165 + $0x60] sm:$0xff]
      %v181 = vld [vmem:[%s165 + $0x68] sm:$0xff]
      %v182 = vld [vmem:[%s165 + $0x78] sm:$0xff]
      %v183 = vld [vmem:[%s165 + $0x80] sm:$0xff]
      %v184 = vld [vmem:[%s165 + $0x90] sm:$0xff]
      %v185 = vld [vmem:[%s165 + $0x98] sm:$0xff]
      %v186 = vld [vmem:[%s165 + $0xa8] sm:$0xff]
      %v187 = vld [vmem:[%s165 + $0xb0] sm:$0xff]
      %v188 = vld [vmem:[%s165 + $0xc0] sm:$0xff]
      %v189 = vld [vmem:[%s165 + $0xc8] sm:$0xff]
      %v190 = vld [vmem:[%s165 + $0xd8] sm:$0xff]
      %v191 = vld [vmem:[%s165 + $0xe0] sm:$0xff]
      %v192 = vld [vmem:[%s165 + $0xf0] sm:$0xff]
      %v193 = vld [vmem:[%s165 + $0xf8] sm:$0xff]
      %v194 = vld [vmem:[%s165 + $0x108] sm:$0xff]
      %v195 = vld [vmem:[%s165 + $0x110] sm:$0xff]
      %v196 = vld [vmem:[%s165 + $0x120] sm:$0xff]
      %v197 = vld [vmem:[%s165 + $0x128] sm:$0xff]
      %v198 = vld [vmem:[%s165 + $0x138] sm:$0xff]
      %v199 = vld [vmem:[%s165 + $0x140] sm:$0xff]
      %v200 = vld [vmem:[%s165 + $0x150] sm:$0xff]
      %v201 = vld [vmem:[%s165 + $0x158] sm:$0xff]
      %v202 = vld [vmem:[%s165 + $0x168] sm:$0xff]
      %v203 = vld [vmem:[%s165 + $0x170] sm:$0xff]
      %vm204 = vcmask 523264
      %205 = vst.msk [vmem:[#allocation2] sm:$0xff] %vm204, %v172
      %206 = vst.msk [vmem:[#allocation2 + $0x28] sm:$0xff] %vm204, %v173
      %207 = vst.msk [vmem:[#allocation2 + $0x50] sm:$0xff] %vm204, %v174
      %208 = vst.msk [vmem:[#allocation2 + $0x78] sm:$0xff] %vm204, %v175
      %209 = vst.msk [vmem:[#allocation2 + $0xa0] sm:$0xff] %vm204, %v176
      %210 = vst.msk [vmem:[#allocation2 + $0xc8] sm:$0xff] %vm204, %v177
      %211 = vst.msk [vmem:[#allocation2 + $0xf0] sm:$0xff] %vm204, %v178
      %212 = vst.msk [vmem:[#allocation2 + $0x118] sm:$0xff] %vm204, %v179
      %213 = vst.msk [vmem:[#allocation2 + $0x140] sm:$0xff] %vm204, %v180
      %214 = vst.msk [vmem:[#allocation2 + $0x168] sm:$0xff] %vm204, %v181
      %215 = vst.msk [vmem:[#allocation2 + $0x190] sm:$0xff] %vm204, %v182
      %216 = vst.msk [vmem:[#allocation2 + $0x1b8] sm:$0xff] %vm204, %v183
      %217 = vst.msk [vmem:[#allocation2 + $0x1e0] sm:$0xff] %vm204, %v184
      %218 = vst.msk [vmem:[#allocation2 + $0x208] sm:$0xff] %vm204, %v185
      %219 = vst.msk [vmem:[#allocation2 + $0x230] sm:$0xff] %vm204, %v186
      %220 = vst.msk [vmem:[#allocation2 + $0x258] sm:$0xff] %vm204, %v187
      %221 = vst.msk [vmem:[#allocation2 + $0x280] sm:$0xff] %vm204, %v188
      %222 = vst.msk [vmem:[#allocation2 + $0x2a8] sm:$0xff] %vm204, %v189
      %223 = vst.msk [vmem:[#allocation2 + $0x2d0] sm:$0xff] %vm204, %v190
      %224 = vst.msk [vmem:[#allocation2 + $0x2f8] sm:$0xff] %vm204, %v191
      %225 = vst.msk [vmem:[#allocation2 + $0x320] sm:$0xff] %vm204, %v192
      %226 = vst.msk [vmem:[#allocation2 + $0x348] sm:$0xff] %vm204, %v193
      %227 = vst.msk [vmem:[#allocation2 + $0x370] sm:$0xff] %vm204, %v194
      %228 = vst.msk [vmem:[#allocation2 + $0x398] sm:$0xff] %vm204, %v195
      %229 = vst.msk [vmem:[#allocation2 + $0x3c0] sm:$0xff] %vm204, %v196
      %230 = vst.msk [vmem:[#allocation2 + $0x3e8] sm:$0xff] %vm204, %v197
      %231 = vst.msk [vmem:[#allocation2 + $0x410] sm:$0xff] %vm204, %v198
      %232 = vst.msk [vmem:[#allocation2 + $0x438] sm:$0xff] %vm204, %v199
      %233 = vst.msk [vmem:[#allocation2 + $0x460] sm:$0xff] %vm204, %v200
      %234 = vst.msk [vmem:[#allocation2 + $0x488] sm:$0xff] %vm204, %v201
      %235 = vst.msk [vmem:[#allocation2 + $0x4b0] sm:$0xff] %vm204, %v202
      %236 = vst.msk [vmem:[#allocation2 + $0x4d8] sm:$0xff] %vm204, %v203
      %v237 = vld [vmem:[%s165 + $0x1] sm:$0xff]
      %v238 = vld [vmem:[%s165 + $0x9] sm:$0xff]
      %v239 = vld [vmem:[%s165 + $0x19] sm:$0xff]
      %v240 = vld [vmem:[%s165 + $0x21] sm:$0xff]
      %v241 = vld [vmem:[%s165 + $0x31] sm:$0xff]
      %v242 = vld [vmem:[%s165 + $0x39] sm:$0xff]
      %v243 = vld [vmem:[%s165 + $0x49] sm:$0xff]
      %v244 = vld [vmem:[%s165 + $0x51] sm:$0xff]
      %v245 = vld [vmem:[%s165 + $0x61] sm:$0xff]
      %v246 = vld [vmem:[%s165 + $0x69] sm:$0xff]
      %v247 = vld [vmem:[%s165 + $0x79] sm:$0xff]
      %v248 = vld [vmem:[%s165 + $0x81] sm:$0xff]
      %v249 = vld [vmem:[%s165 + $0x91] sm:$0xff]
      %v250 = vld [vmem:[%s165 + $0x99] sm:$0xff]
      %v251 = vld [vmem:[%s165 + $0xa9] sm:$0xff]
      %v252 = vld [vmem:[%s165 + $0xb1] sm:$0xff]
      %v253 = vld [vmem:[%s165 + $0xc1] sm:$0xff]
      %v254 = vld [vmem:[%s165 + $0xc9] sm:$0xff]
      %v255 = vld [vmem:[%s165 + $0xd9] sm:$0xff]
      %v256 = vld [vmem:[%s165 + $0xe1] sm:$0xff]
      %v257 = vld [vmem:[%s165 + $0xf1] sm:$0xff]
      %v258 = vld [vmem:[%s165 + $0xf9] sm:$0xff]
      %v259 = vld [vmem:[%s165 + $0x109] sm:$0xff]
      %v260 = vld [vmem:[%s165 + $0x111] sm:$0xff]
      %v261 = vld [vmem:[%s165 + $0x121] sm:$0xff]
      %v262 = vld [vmem:[%s165 + $0x129] sm:$0xff]
      %v263 = vld [vmem:[%s165 + $0x139] sm:$0xff]
      %v264 = vld [vmem:[%s165 + $0x141] sm:$0xff]
      %v265 = vld [vmem:[%s165 + $0x151] sm:$0xff]
      %v266 = vld [vmem:[%s165 + $0x159] sm:$0xff]
      %v267 = vld [vmem:[%s165 + $0x169] sm:$0xff]
      %v268 = vld [vmem:[%s165 + $0x171] sm:$0xff]
      %301 = vrot.lane.b32.xlu0 %v237, 64
      %v302 = vpop.permute.xlu0 %301
      %303 = vrot.lane.b32.xlu0 %v238, 64
      %v304 = vpop.permute.xlu0 %303
      %305 = vrot.lane.b32.xlu0 %v239, 64
      %v306 = vpop.permute.xlu0 %305
      %307 = vrot.lane.b32.xlu0 %v240, 64
      %v308 = vpop.permute.xlu0 %307
      %309 = vrot.lane.b32.xlu0 %v241, 64
      %v310 = vpop.permute.xlu0 %309
      %311 = vrot.lane.b32.xlu0 %v242, 64
      %v312 = vpop.permute.xlu0 %311
      %313 = vrot.lane.b32.xlu0 %v243, 64
      %v314 = vpop.permute.xlu0 %313
      %315 = vrot.lane.b32.xlu0 %v244, 64
      %v316 = vpop.permute.xlu0 %315
      %317 = vrot.lane.b32.xlu0 %v245, 64
      %v318 = vpop.permute.xlu0 %317
      %319 = vrot.lane.b32.xlu0 %v246, 64
      %v320 = vpop.permute.xlu0 %319
      %321 = vrot.lane.b32.xlu0 %v247, 64
      %v322 = vpop.permute.xlu0 %321
      %323 = vrot.lane.b32.xlu0 %v248, 64
      %v324 = vpop.permute.xlu0 %323
      %325 = vrot.lane.b32.xlu0 %v249, 64
      %v326 = vpop.permute.xlu0 %325
      %327 = vrot.lane.b32.xlu0 %v250, 64
      %v328 = vpop.permute.xlu0 %327
      %329 = vrot.lane.b32.xlu0 %v251, 64
      %v330 = vpop.permute.xlu0 %329
      %331 = vrot.lane.b32.xlu0 %v252, 64
      %v332 = vpop.permute.xlu0 %331
      %333 = vrot.lane.b32.xlu0 %v253, 64
      %v334 = vpop.permute.xlu0 %333
      %335 = vrot.lane.b32.xlu0 %v254, 64
      %v336 = vpop.permute.xlu0 %335
      %337 = vrot.lane.b32.xlu0 %v255, 64
      %v338 = vpop.permute.xlu0 %337
      %339 = vrot.lane.b32.xlu0 %v256, 64
      %v340 = vpop.permute.xlu0 %339
      %341 = vrot.lane.b32.xlu0 %v257, 64
      %v342 = vpop.permute.xlu0 %341
      %343 = vrot.lane.b32.xlu0 %v258, 64
      %v344 = vpop.permute.xlu0 %343
      %345 = vrot.lane.b32.xlu0 %v259, 64
      %v346 = vpop.permute.xlu0 %345
      %347 = vrot.lane.b32.xlu0 %v260, 64
      %v348 = vpop.permute.xlu0 %347
      %349 = vrot.lane.b32.xlu0 %v261, 64
      %v350 = vpop.permute.xlu0 %349
      %351 = vrot.lane.b32.xlu0 %v262, 64
      %v352 = vpop.permute.xlu0 %351
      %353 = vrot.lane.b32.xlu0 %v263, 64
      %v354 = vpop.permute.xlu0 %353
      %355 = vrot.lane.b32.xlu0 %v264, 64
      %v356 = vpop.permute.xlu0 %355
      %357 = vrot.lane.b32.xlu0 %v265, 64
      %v358 = vpop.permute.xlu0 %357
      %359 = vrot.lane.b32.xlu0 %v266, 64
      %v360 = vpop.permute.xlu0 %359
      %361 = vrot.lane.b32.xlu0 %v267, 64
      %v362 = vpop.permute.xlu0 %361
      %363 = vrot.lane.b32.xlu0 %v268, 64
      %v364 = vpop.permute.xlu0 %363
      %vm397 = vcmask 1048064
      %398 = vst.msk [vmem:[#allocation2] sm:$0xff] %vm397, %v302
      %399 = vst.msk [vmem:[#allocation2 + $0x28] sm:$0xff] %vm397, %v304
      %400 = vst.msk [vmem:[#allocation2 + $0x50] sm:$0xff] %vm397, %v306
      %401 = vst.msk [vmem:[#allocation2 + $0x78] sm:$0xff] %vm397, %v308
      %402 = vst.msk [vmem:[#allocation2 + $0xa0] sm:$0xff] %vm397, %v310
      %403 = vst.msk [vmem:[#allocation2 + $0xc8] sm:$0xff] %vm397, %v312
      %404 = vst.msk [vmem:[#allocation2 + $0xf0] sm:$0xff] %vm397, %v314
      %405 = vst.msk [vmem:[#allocation2 + $0x118] sm:$0xff] %vm397, %v316
      %406 = vst.msk [vmem:[#allocation2 + $0x140] sm:$0xff] %vm397, %v318
      %407 = vst.msk [vmem:[#allocation2 + $0x168] sm:$0xff] %vm397, %v320
      %408 = vst.msk [vmem:[#allocation2 + $0x190] sm:$0xff] %vm397, %v322
      %409 = vst.msk [vmem:[#allocation2 + $0x1b8] sm:$0xff] %vm397, %v324
      %410 = vst.msk [vmem:[#allocation2 + $0x1e0] sm:$0xff] %vm397, %v326
      %411 = vst.msk [vmem:[#allocation2 + $0x208] sm:$0xff] %vm397, %v328
      %412 = vst.msk [vmem:[#allocation2 + $0x230] sm:$0xff] %vm397, %v330
      %413 = vst.msk [vmem:[#allocation2 + $0x258] sm:$0xff] %vm397, %v332
      %414 = vst.msk [vmem:[#allocation2 + $0x280] sm:$0xff] %vm397, %v334
      %415 = vst.msk [vmem:[#allocation2 + $0x2a8] sm:$0xff] %vm397, %v336
      %416 = vst.msk [vmem:[#allocation2 + $0x2d0] sm:$0xff] %vm397, %v338
      %417 = vst.msk [vmem:[#allocation2 + $0x2f8] sm:$0xff] %vm397, %v340
      %418 = vst.msk [vmem:[#allocation2 + $0x320] sm:$0xff] %vm397, %v342
      %419 = vst.msk [vmem:[#allocation2 + $0x348] sm:$0xff] %vm397, %v344
      %420 = vst.msk [vmem:[#allocation2 + $0x370] sm:$0xff] %vm397, %v346
      %421 = vst.msk [vmem:[#allocation2 + $0x398] sm:$0xff] %vm397, %v348
      %422 = vst.msk [vmem:[#allocation2 + $0x3c0] sm:$0xff] %vm397, %v350
      %423 = vst.msk [vmem:[#allocation2 + $0x3e8] sm:$0xff] %vm397, %v352
      %424 = vst.msk [vmem:[#allocation2 + $0x410] sm:$0xff] %vm397, %v354
      %425 = vst.msk [vmem:[#allocation2 + $0x438] sm:$0xff] %vm397, %v356
      %426 = vst.msk [vmem:[#allocation2 + $0x460] sm:$0xff] %vm397, %v358
      %427 = vst.msk [vmem:[#allocation2 + $0x488] sm:$0xff] %vm397, %v360
      %428 = vst.msk [vmem:[#allocation2 + $0x4b0] sm:$0xff] %vm397, %v362
      %429 = vst.msk [vmem:[#allocation2 + $0x4d8] sm:$0xff] %vm397, %v364
      %v430 = vld [vmem:[%s165 + $0x2] sm:$0xff]
      %v431 = vld [vmem:[%s165 + $0xa] sm:$0xff]
      %v432 = vld [vmem:[%s165 + $0x1a] sm:$0xff]
      %v433 = vld [vmem:[%s165 + $0x22] sm:$0xff]
      %v434 = vld [vmem:[%s165 + $0x32] sm:$0xff]
      %v435 = vld [vmem:[%s165 + $0x3a] sm:$0xff]
      %v436 = vld [vmem:[%s165 + $0x4a] sm:$0xff]
      %v437 = vld [vmem:[%s165 + $0x52] sm:$0xff]
      %v438 = vld [vmem:[%s165 + $0x62] sm:$0xff]
      %v439 = vld [vmem:[%s165 + $0x6a] sm:$0xff]
      %v440 = vld [vmem:[%s165 + $0x7a] sm:$0xff]
      %v441 = vld [vmem:[%s165 + $0x82] sm:$0xff]
      %v442 = vld [vmem:[%s165 + $0x92] sm:$0xff]
      %v443 = vld [vmem:[%s165 + $0x9a] sm:$0xff]
      %v444 = vld [vmem:[%s165 + $0xaa] sm:$0xff]
      %v445 = vld [vmem:[%s165 + $0xb2] sm:$0xff]
      %v446 = vld [vmem:[%s165 + $0xc2] sm:$0xff]
      %v447 = vld [vmem:[%s165 + $0xca] sm:$0xff]
      %v448 = vld [vmem:[%s165 + $0xda] sm:$0xff]
      %v449 = vld [vmem:[%s165 + $0xe2] sm:$0xff]
      %v450 = vld [vmem:[%s165 + $0xf2] sm:$0xff]
      %v451 = vld [vmem:[%s165 + $0xfa] sm:$0xff]
      %v452 = vld [vmem:[%s165 + $0x10a] sm:$0xff]
      %v453 = vld [vmem:[%s165 + $0x112] sm:$0xff]
      %v454 = vld [vmem:[%s165 + $0x122] sm:$0xff]
      %v455 = vld [vmem:[%s165 + $0x12a] sm:$0xff]
      %v456 = vld [vmem:[%s165 + $0x13a] sm:$0xff]
      %v457 = vld [vmem:[%s165 + $0x142] sm:$0xff]
      %v458 = vld [vmem:[%s165 + $0x152] sm:$0xff]
      %v459 = vld [vmem:[%s165 + $0x15a] sm:$0xff]
      %v460 = vld [vmem:[%s165 + $0x16a] sm:$0xff]
      %v461 = vld [vmem:[%s165 + $0x172] sm:$0xff]
      %462 = vst.msk [vmem:[#allocation2 + $0x8] sm:$0xff] %vm204, %v430
      %463 = vst.msk [vmem:[#allocation2 + $0x30] sm:$0xff] %vm204, %v431
      %464 = vst.msk [vmem:[#allocation2 + $0x58] sm:$0xff] %vm204, %v432
      %465 = vst.msk [vmem:[#allocation2 + $0x80] sm:$0xff] %vm204, %v433
      %466 = vst.msk [vmem:[#allocation2 + $0xa8] sm:$0xff] %vm204, %v434
      %467 = vst.msk [vmem:[#allocation2 + $0xd0] sm:$0xff] %vm204, %v435
      %468 = vst.msk [vmem:[#allocation2 + $0xf8] sm:$0xff] %vm204, %v436
      %469 = vst.msk [vmem:[#allocation2 + $0x120] sm:$0xff] %vm204, %v437
      %470 = vst.msk [vmem:[#allocation2 + $0x148] sm:$0xff] %vm204, %v438
      %471 = vst.msk [vmem:[#allocation2 + $0x170] sm:$0xff] %vm204, %v439
      %472 = vst.msk [vmem:[#allocation2 + $0x198] sm:$0xff] %vm204, %v440
      %473 = vst.msk [vmem:[#allocation2 + $0x1c0] sm:$0xff] %vm204, %v441
      %474 = vst.msk [vmem:[#allocation2 + $0x1e8] sm:$0xff] %vm204, %v442
      %475 = vst.msk [vmem:[#allocation2 + $0x210] sm:$0xff] %vm204, %v443
      %476 = vst.msk [vmem:[#allocation2 + $0x238] sm:$0xff] %vm204, %v444
      %477 = vst.msk [vmem:[#allocation2 + $0x260] sm:$0xff] %vm204, %v445
      %478 = vst.msk [vmem:[#allocation2 + $0x288] sm:$0xff] %vm204, %v446
      %479 = vst.msk [vmem:[#allocation2 + $0x2b0] sm:$0xff] %vm204, %v447
      %480 = vst.msk [vmem:[#allocation2 + $0x2d8] sm:$0xff] %vm204, %v448
      %481 = vst.msk [vmem:[#allocation2 + $0x300] sm:$0xff] %vm204, %v449
      %482 = vst.msk [vmem:[#allocation2 + $0x328] sm:$0xff] %vm204, %v450
      %483 = vst.msk [vmem:[#allocation2 + $0x350] sm:$0xff] %vm204, %v451
      %484 = vst.msk [vmem:[#allocation2 + $0x378] sm:$0xff] %vm204, %v452
      %485 = vst.msk [vmem:[#allocation2 + $0x3a0] sm:$0xff] %vm204, %v453
      %486 = vst.msk [vmem:[#allocation2 + $0x3c8] sm:$0xff] %vm204, %v454
      %487 = vst.msk [vmem:[#allocation2 + $0x3f0] sm:$0xff] %vm204, %v455
      %488 = vst.msk [vmem:[#allocation2 + $0x418] sm:$0xff] %vm204, %v456
      %489 = vst.msk [vmem:[#allocation2 + $0x440] sm:$0xff] %vm204, %v457
      %490 = vst.msk [vmem:[#allocation2 + $0x468] sm:$0xff] %vm204, %v458
      %491 = vst.msk [vmem:[#allocation2 + $0x490] sm:$0xff] %vm204, %v459
      %492 = vst.msk [vmem:[#allocation2 + $0x4b8] sm:$0xff] %vm204, %v460
      %493 = vst.msk [vmem:[#allocation2 + $0x4e0] sm:$0xff] %vm204, %v461
      %s494 = scalar_lea.vmem %s165, 24
      %v495 = vld [vmem:[%s494] sm:$0xff]
      %v496 = vld [vmem:[%s494 + $0x8] sm:$0xff]
      %v497 = vld [vmem:[%s494 + $0x18] sm:$0xff]
      %v498 = vld [vmem:[%s494 + $0x20] sm:$0xff]
      %v499 = vld [vmem:[%s494 + $0x30] sm:$0xff]
      %v500 = vld [vmem:[%s494 + $0x38] sm:$0xff]
      %v501 = vld [vmem:[%s494 + $0x48] sm:$0xff]
      %v502 = vld [vmem:[%s494 + $0x50] sm:$0xff]
      %v503 = vld [vmem:[%s494 + $0x60] sm:$0xff]
      %v504 = vld [vmem:[%s494 + $0x68] sm:$0xff]
      %v505 = vld [vmem:[%s494 + $0x78] sm:$0xff]
      %v506 = vld [vmem:[%s494 + $0x80] sm:$0xff]
      %v507 = vld [vmem:[%s494 + $0x90] sm:$0xff]
      %v508 = vld [vmem:[%s494 + $0x98] sm:$0xff]
      %v509 = vld [vmem:[%s494 + $0xa8] sm:$0xff]
      %v510 = vld [vmem:[%s494 + $0xb0] sm:$0xff]
      %v511 = vld [vmem:[%s494 + $0xc0] sm:$0xff]
      %v512 = vld [vmem:[%s494 + $0xc8] sm:$0xff]
      %v513 = vld [vmem:[%s494 + $0xd8] sm:$0xff]
      %v514 = vld [vmem:[%s494 + $0xe0] sm:$0xff]
      %v515 = vld [vmem:[%s494 + $0xf0] sm:$0xff]
      %v516 = vld [vmem:[%s494 + $0xf8] sm:$0xff]
      %v517 = vld [vmem:[%s494 + $0x108] sm:$0xff]
      %v518 = vld [vmem:[%s494 + $0x110] sm:$0xff]
      %v519 = vld [vmem:[%s494 + $0x120] sm:$0xff]
      %v520 = vld [vmem:[%s494 + $0x128] sm:$0xff]
      %v521 = vld [vmem:[%s494 + $0x138] sm:$0xff]
      %v522 = vld [vmem:[%s494 + $0x140] sm:$0xff]
      %v523 = vld [vmem:[%s494 + $0x150] sm:$0xff]
      %v524 = vld [vmem:[%s494 + $0x158] sm:$0xff]
      %v525 = vld [vmem:[%s494 + $0x168] sm:$0xff]
      %v526 = vld [vmem:[%s494 + $0x170] sm:$0xff]
      %559 = vrot.lane.b32.xlu0 %v495, 64
      %v560 = vpop.permute.xlu0 %559
      %561 = vrot.lane.b32.xlu0 %v496, 64
      %v562 = vpop.permute.xlu0 %561
      %563 = vrot.lane.b32.xlu0 %v497, 64
      %v564 = vpop.permute.xlu0 %563
      %565 = vrot.lane.b32.xlu0 %v498, 64
      %v566 = vpop.permute.xlu0 %565
      %567 = vrot.lane.b32.xlu0 %v499, 64
      %v568 = vpop.permute.xlu0 %567
      %569 = vrot.lane.b32.xlu0 %v500, 64
      %v570 = vpop.permute.xlu0 %569
      %571 = vrot.lane.b32.xlu0 %v501, 64
      %v572 = vpop.permute.xlu0 %571
      %573 = vrot.lane.b32.xlu0 %v502, 64
      %v574 = vpop.permute.xlu0 %573
      %575 = vrot.lane.b32.xlu0 %v503, 64
      %v576 = vpop.permute.xlu0 %575
      %577 = vrot.lane.b32.xlu0 %v504, 64
      %v578 = vpop.permute.xlu0 %577
      %579 = vrot.lane.b32.xlu0 %v505, 64
      %v580 = vpop.permute.xlu0 %579
      %581 = vrot.lane.b32.xlu0 %v506, 64
      %v582 = vpop.permute.xlu0 %581
      %583 = vrot.lane.b32.xlu0 %v507, 64
      %v584 = vpop.permute.xlu0 %583
      %585 = vrot.lane.b32.xlu0 %v508, 64
      %v586 = vpop.permute.xlu0 %585
      %587 = vrot.lane.b32.xlu0 %v509, 64
      %v588 = vpop.permute.xlu0 %587
      %589 = vrot.lane.b32.xlu0 %v510, 64
      %v590 = vpop.permute.xlu0 %589
      %591 = vrot.lane.b32.xlu0 %v511, 64
      %v592 = vpop.permute.xlu0 %591
      %593 = vrot.lane.b32.xlu0 %v512, 64
      %v594 = vpop.permute.xlu0 %593
      %595 = vrot.lane.b32.xlu0 %v513, 64
      %v596 = vpop.permute.xlu0 %595
      %597 = vrot.lane.b32.xlu0 %v514, 64
      %v598 = vpop.permute.xlu0 %597
      %599 = vrot.lane.b32.xlu0 %v515, 64
      %v600 = vpop.permute.xlu0 %599
      %601 = vrot.lane.b32.xlu0 %v516, 64
      %v602 = vpop.permute.xlu0 %601
      %603 = vrot.lane.b32.xlu0 %v517, 64
      %v604 = vpop.permute.xlu0 %603
      %605 = vrot.lane.b32.xlu0 %v518, 64
      %v606 = vpop.permute.xlu0 %605
      %607 = vrot.lane.b32.xlu0 %v519, 64
      %v608 = vpop.permute.xlu0 %607
      %609 = vrot.lane.b32.xlu0 %v520, 64
      %v610 = vpop.permute.xlu0 %609
      %611 = vrot.lane.b32.xlu0 %v521, 64
      %v612 = vpop.permute.xlu0 %611
      %613 = vrot.lane.b32.xlu0 %v522, 64
      %v614 = vpop.permute.xlu0 %613
      %615 = vrot.lane.b32.xlu0 %v523, 64
      %v616 = vpop.permute.xlu0 %615
      %617 = vrot.lane.b32.xlu0 %v524, 64
      %v618 = vpop.permute.xlu0 %617
      %619 = vrot.lane.b32.xlu0 %v525, 64
      %v620 = vpop.permute.xlu0 %619
      %621 = vrot.lane.b32.xlu0 %v526, 64
      %v622 = vpop.permute.xlu0 %621
      %655 = vst.msk [vmem:[#allocation2 + $0x8] sm:$0xff] %vm397, %v560
      %656 = vst.msk [vmem:[#allocation2 + $0x30] sm:$0xff] %vm397, %v562
      %657 = vst.msk [vmem:[#allocation2 + $0x58] sm:$0xff] %vm397, %v564
      %658 = vst.msk [vmem:[#allocation2 + $0x80] sm:$0xff] %vm397, %v566
      %659 = vst.msk [vmem:[#allocation2 + $0xa8] sm:$0xff] %vm397, %v568
      %660 = vst.msk [vmem:[#allocation2 + $0xd0] sm:$0xff] %vm397, %v570
      %661 = vst.msk [vmem:[#allocation2 + $0xf8] sm:$0xff] %vm397, %v572
      %662 = vst.msk [vmem:[#allocation2 + $0x120] sm:$0xff] %vm397, %v574
      %663 = vst.msk [vmem:[#allocation2 + $0x148] sm:$0xff] %vm397, %v576
      %664 = vst.msk [vmem:[#allocation2 + $0x170] sm:$0xff] %vm397, %v578
      %665 = vst.msk [vmem:[#allocation2 + $0x198] sm:$0xff] %vm397, %v580
      %666 = vst.msk [vmem:[#allocation2 + $0x1c0] sm:$0xff] %vm397, %v582
      %667 = vst.msk [vmem:[#allocation2 + $0x1e8] sm:$0xff] %vm397, %v584
      %668 = vst.msk [vmem:[#allocation2 + $0x210] sm:$0xff] %vm397, %v586
      %669 = vst.msk [vmem:[#allocation2 + $0x238] sm:$0xff] %vm397, %v588
      %670 = vst.msk [vmem:[#allocation2 + $0x260] sm:$0xff] %vm397, %v590
      %671 = vst.msk [vmem:[#allocation2 + $0x288] sm:$0xff] %vm397, %v592
      %672 = vst.msk [vmem:[#allocation2 + $0x2b0] sm:$0xff] %vm397, %v594
      %673 = vst.msk [vmem:[#allocation2 + $0x2d8] sm:$0xff] %vm397, %v596
      %674 = vst.msk [vmem:[#allocation2 + $0x300] sm:$0xff] %vm397, %v598
      %675 = vst.msk [vmem:[#allocation2 + $0x328] sm:$0xff] %vm397, %v600
      %676 = vst.msk [vmem:[#allocation2 + $0x350] sm:$0xff] %vm397, %v602
      %677 = vst.msk [vmem:[#allocation2 + $0x378] sm:$0xff] %vm397, %v604
      %678 = vst.msk [vmem:[#allocation2 + $0x3a0] sm:$0xff] %vm397, %v606
      %679 = vst.msk [vmem:[#allocation2 + $0x3c8] sm:$0xff] %vm397, %v608
      %680 = vst.msk [vmem:[#allocation2 + $0x3f0] sm:$0xff] %vm397, %v610
      %681 = vst.msk [vmem:[#allocation2 + $0x418] sm:$0xff] %vm397, %v612
      %682 = vst.msk [vmem:[#allocation2 + $0x440] sm:$0xff] %vm397, %v614
      %683 = vst.msk [vmem:[#allocation2 + $0x468] sm:$0xff] %vm397, %v616
      %684 = vst.msk [vmem:[#allocation2 + $0x490] sm:$0xff] %vm397, %v618
      %685 = vst.msk [vmem:[#allocation2 + $0x4b8] sm:$0xff] %vm397, %v620
      %686 = vst.msk [vmem:[#allocation2 + $0x4e0] sm:$0xff] %vm397, %v622
      %v687 = vld [vmem:[%s494 + $0x1] sm:$0xff]
      %v688 = vld [vmem:[%s494 + $0x9] sm:$0xff]
      %v689 = vld [vmem:[%s494 + $0x19] sm:$0xff]
      %v690 = vld [vmem:[%s494 + $0x21] sm:$0xff]
      %v691 = vld [vmem:[%s494 + $0x31] sm:$0xff]
      %v692 = vld [vmem:[%s494 + $0x39] sm:$0xff]
      %v693 = vld [vmem:[%s494 + $0x49] sm:$0xff]
      %v694 = vld [vmem:[%s494 + $0x51] sm:$0xff]
      %v695 = vld [vmem:[%s494 + $0x61] sm:$0xff]
      %v696 = vld [vmem:[%s494 + $0x69] sm:$0xff]
      %v697 = vld [vmem:[%s494 + $0x79] sm:$0xff]
      %v698 = vld [vmem:[%s494 + $0x81] sm:$0xff]
      %v699 = vld [vmem:[%s494 + $0x91] sm:$0xff]
      %v700 = vld [vmem:[%s494 + $0x99] sm:$0xff]
      %v701 = vld [vmem:[%s494 + $0xa9] sm:$0xff]
      %v702 = vld [vmem:[%s494 + $0xb1] sm:$0xff]
      %v703 = vld [vmem:[%s494 + $0xc1] sm:$0xff]
      %v704 = vld [vmem:[%s494 + $0xc9] sm:$0xff]
      %v705 = vld [vmem:[%s494 + $0xd9] sm:$0xff]
      %v706 = vld [vmem:[%s494 + $0xe1] sm:$0xff]
      %v707 = vld [vmem:[%s494 + $0xf1] sm:$0xff]
      %v708 = vld [vmem:[%s494 + $0xf9] sm:$0xff]
      %v709 = vld [vmem:[%s494 + $0x109] sm:$0xff]
      %v710 = vld [vmem:[%s494 + $0x111] sm:$0xff]
      %v711 = vld [vmem:[%s494 + $0x121] sm:$0xff]
      %v712 = vld [vmem:[%s494 + $0x129] sm:$0xff]
      %v713 = vld [vmem:[%s494 + $0x139] sm:$0xff]
      %v714 = vld [vmem:[%s494 + $0x141] sm:$0xff]
      %v715 = vld [vmem:[%s494 + $0x151] sm:$0xff]
      %v716 = vld [vmem:[%s494 + $0x159] sm:$0xff]
      %v717 = vld [vmem:[%s494 + $0x169] sm:$0xff]
      %v718 = vld [vmem:[%s494 + $0x171] sm:$0xff]
      %719 = vst.msk [vmem:[#allocation2 + $0x10] sm:$0xff] %vm204, %v687
      %720 = vst.msk [vmem:[#allocation2 + $0x38] sm:$0xff] %vm204, %v688
      %721 = vst.msk [vmem:[#allocation2 + $0x60] sm:$0xff] %vm204, %v689
      %722 = vst.msk [vmem:[#allocation2 + $0x88] sm:$0xff] %vm204, %v690
      %723 = vst.msk [vmem:[#allocation2 + $0xb0] sm:$0xff] %vm204, %v691
      %724 = vst.msk [vmem:[#allocation2 + $0xd8] sm:$0xff] %vm204, %v692
      %725 = vst.msk [vmem:[#allocation2 + $0x100] sm:$0xff] %vm204, %v693
      %726 = vst.msk [vmem:[#allocation2 + $0x128] sm:$0xff] %vm204, %v694
      %727 = vst.msk [vmem:[#allocation2 + $0x150] sm:$0xff] %vm204, %v695
      %728 = vst.msk [vmem:[#allocation2 + $0x178] sm:$0xff] %vm204, %v696
      %729 = vst.msk [vmem:[#allocation2 + $0x1a0] sm:$0xff] %vm204, %v697
      %730 = vst.msk [vmem:[#allocation2 + $0x1c8] sm:$0xff] %vm204, %v698
      %731 = vst.msk [vmem:[#allocation2 + $0x1f0] sm:$0xff] %vm204, %v699
      %732 = vst.msk [vmem:[#allocation2 + $0x218] sm:$0xff] %vm204, %v700
      %733 = vst.msk [vmem:[#allocation2 + $0x240] sm:$0xff] %vm204, %v701
      %734 = vst.msk [vmem:[#allocation2 + $0x268] sm:$0xff] %vm204, %v702
      %735 = vst.msk [vmem:[#allocation2 + $0x290] sm:$0xff] %vm204, %v703
      %736 = vst.msk [vmem:[#allocation2 + $0x2b8] sm:$0xff] %vm204, %v704
      %737 = vst.msk [vmem:[#allocation2 + $0x2e0] sm:$0xff] %vm204, %v705
      %738 = vst.msk [vmem:[#allocation2 + $0x308] sm:$0xff] %vm204, %v706
      %739 = vst.msk [vmem:[#allocation2 + $0x330] sm:$0xff] %vm204, %v707
      %740 = vst.msk [vmem:[#allocation2 + $0x358] sm:$0xff] %vm204, %v708
      %741 = vst.msk [vmem:[#allocation2 + $0x380] sm:$0xff] %vm204, %v709
      %742 = vst.msk [vmem:[#allocation2 + $0x3a8] sm:$0xff] %vm204, %v710
      %743 = vst.msk [vmem:[#allocation2 + $0x3d0] sm:$0xff] %vm204, %v711
      %744 = vst.msk [vmem:[#allocation2 + $0x3f8] sm:$0xff] %vm204, %v712
      %745 = vst.msk [vmem:[#allocation2 + $0x420] sm:$0xff] %vm204, %v713
      %746 = vst.msk [vmem:[#allocation2 + $0x448] sm:$0xff] %vm204, %v714
      %747 = vst.msk [vmem:[#allocation2 + $0x470] sm:$0xff] %vm204, %v715
      %748 = vst.msk [vmem:[#allocation2 + $0x498] sm:$0xff] %vm204, %v716
      %749 = vst.msk [vmem:[#allocation2 + $0x4c0] sm:$0xff] %vm204, %v717
      %750 = vst.msk [vmem:[#allocation2 + $0x4e8] sm:$0xff] %vm204, %v718
      %v751 = vld [vmem:[%s494 + $0x2] sm:$0xff]
      %v752 = vld [vmem:[%s494 + $0xa] sm:$0xff]
      %v753 = vld [vmem:[%s494 + $0x1a] sm:$0xff]
      %v754 = vld [vmem:[%s494 + $0x22] sm:$0xff]
      %v755 = vld [vmem:[%s494 + $0x32] sm:$0xff]
      %v756 = vld [vmem:[%s494 + $0x3a] sm:$0xff]
      %v757 = vld [vmem:[%s494 + $0x4a] sm:$0xff]
      %v758 = vld [vmem:[%s494 + $0x52] sm:$0xff]
      %v759 = vld [vmem:[%s494 + $0x62] sm:$0xff]
      %v760 = vld [vmem:[%s494 + $0x6a] sm:$0xff]
      %v761 = vld [vmem:[%s494 + $0x7a] sm:$0xff]
      %v762 = vld [vmem:[%s494 + $0x82] sm:$0xff]
      %v763 = vld [vmem:[%s494 + $0x92] sm:$0xff]
      %v764 = vld [vmem:[%s494 + $0x9a] sm:$0xff]
      %v765 = vld [vmem:[%s494 + $0xaa] sm:$0xff]
      %v766 = vld [vmem:[%s494 + $0xb2] sm:$0xff]
      %v767 = vld [vmem:[%s494 + $0xc2] sm:$0xff]
      %v768 = vld [vmem:[%s494 + $0xca] sm:$0xff]
      %v769 = vld [vmem:[%s494 + $0xda] sm:$0xff]
      %v770 = vld [vmem:[%s494 + $0xe2] sm:$0xff]
      %v771 = vld [vmem:[%s494 + $0xf2] sm:$0xff]
      %v772 = vld [vmem:[%s494 + $0xfa] sm:$0xff]
      %v773 = vld [vmem:[%s494 + $0x10a] sm:$0xff]
      %v774 = vld [vmem:[%s494 + $0x112] sm:$0xff]
      %v775 = vld [vmem:[%s494 + $0x122] sm:$0xff]
      %v776 = vld [vmem:[%s494 + $0x12a] sm:$0xff]
      %v777 = vld [vmem:[%s494 + $0x13a] sm:$0xff]
      %v778 = vld [vmem:[%s494 + $0x142] sm:$0xff]
      %v779 = vld [vmem:[%s494 + $0x152] sm:$0xff]
      %v780 = vld [vmem:[%s494 + $0x15a] sm:$0xff]
      %v781 = vld [vmem:[%s494 + $0x16a] sm:$0xff]
      %v782 = vld [vmem:[%s494 + $0x172] sm:$0xff]
      %815 = vrot.lane.b32.xlu0 %v751, 64
      %v816 = vpop.permute.xlu0 %815
      %817 = vrot.lane.b32.xlu0 %v752, 64
      %v818 = vpop.permute.xlu0 %817
      %819 = vrot.lane.b32.xlu0 %v753, 64
      %v820 = vpop.permute.xlu0 %819
      %821 = vrot.lane.b32.xlu0 %v754, 64
      %v822 = vpop.permute.xlu0 %821
      %823 = vrot.lane.b32.xlu0 %v755, 64
      %v824 = vpop.permute.xlu0 %823
      %825 = vrot.lane.b32.xlu0 %v756, 64
      %v826 = vpop.permute.xlu0 %825
      %827 = vrot.lane.b32.xlu0 %v757, 64
      %v828 = vpop.permute.xlu0 %827
      %829 = vrot.lane.b32.xlu0 %v758, 64
      %v830 = vpop.permute.xlu0 %829
      %831 = vrot.lane.b32.xlu0 %v759, 64
      %v832 = vpop.permute.xlu0 %831
      %833 = vrot.lane.b32.xlu0 %v760, 64
      %v834 = vpop.permute.xlu0 %833
      %835 = vrot.lane.b32.xlu0 %v761, 64
      %v836 = vpop.permute.xlu0 %835
      %837 = vrot.lane.b32.xlu0 %v762, 64
      %v838 = vpop.permute.xlu0 %837
      %839 = vrot.lane.b32.xlu0 %v763, 64
      %v840 = vpop.permute.xlu0 %839
      %841 = vrot.lane.b32.xlu0 %v764, 64
      %v842 = vpop.permute.xlu0 %841
      %843 = vrot.lane.b32.xlu0 %v765, 64
      %v844 = vpop.permute.xlu0 %843
      %845 = vrot.lane.b32.xlu0 %v766, 64
      %v846 = vpop.permute.xlu0 %845
      %847 = vrot.lane.b32.xlu0 %v767, 64
      %v848 = vpop.permute.xlu0 %847
      %849 = vrot.lane.b32.xlu0 %v768, 64
      %v850 = vpop.permute.xlu0 %849
      %851 = vrot.lane.b32.xlu0 %v769, 64
      %v852 = vpop.permute.xlu0 %851
      %853 = vrot.lane.b32.xlu0 %v770, 64
      %v854 = vpop.permute.xlu0 %853
      %855 = vrot.lane.b32.xlu0 %v771, 64
      %v856 = vpop.permute.xlu0 %855
      %857 = vrot.lane.b32.xlu0 %v772, 64
      %v858 = vpop.permute.xlu0 %857
      %859 = vrot.lane.b32.xlu0 %v773, 64
      %v860 = vpop.permute.xlu0 %859
      %861 = vrot.lane.b32.xlu0 %v774, 64
      %v862 = vpop.permute.xlu0 %861
      %863 = vrot.lane.b32.xlu0 %v775, 64
      %v864 = vpop.permute.xlu0 %863
      %865 = vrot.lane.b32.xlu0 %v776, 64
      %v866 = vpop.permute.xlu0 %865
      %867 = vrot.lane.b32.xlu0 %v777, 64
      %v868 = vpop.permute.xlu0 %867
      %869 = vrot.lane.b32.xlu0 %v778, 64
      %v870 = vpop.permute.xlu0 %869
      %871 = vrot.lane.b32.xlu0 %v779, 64
      %v872 = vpop.permute.xlu0 %871
      %873 = vrot.lane.b32.xlu0 %v780, 64
      %v874 = vpop.permute.xlu0 %873
      %875 = vrot.lane.b32.xlu0 %v781, 64
      %v876 = vpop.permute.xlu0 %875
      %877 = vrot.lane.b32.xlu0 %v782, 64
      %v878 = vpop.permute.xlu0 %877
      %911 = vst.msk [vmem:[#allocation2 + $0x10] sm:$0xff] %vm397, %v816
      %912 = vst.msk [vmem:[#allocation2 + $0x38] sm:$0xff] %vm397, %v818
      %913 = vst.msk [vmem:[#allocation2 + $0x60] sm:$0xff] %vm397, %v820
      %914 = vst.msk [vmem:[#allocation2 + $0x88] sm:$0xff] %vm397, %v822
      %915 = vst.msk [vmem:[#allocation2 + $0xb0] sm:$0xff] %vm397, %v824
      %916 = vst.msk [vmem:[#allocation2 + $0xd8] sm:$0xff] %vm397, %v826
      %917 = vst.msk [vmem:[#allocation2 + $0x100] sm:$0xff] %vm397, %v828
      %918 = vst.msk [vmem:[#allocation2 + $0x128] sm:$0xff] %vm397, %v830
      %919 = vst.msk [vmem:[#allocation2 + $0x150] sm:$0xff] %vm397, %v832
      %920 = vst.msk [vmem:[#allocation2 + $0x178] sm:$0xff] %vm397, %v834
      %921 = vst.msk [vmem:[#allocation2 + $0x1a0] sm:$0xff] %vm397, %v836
      %922 = vst.msk [vmem:[#allocation2 + $0x1c8] sm:$0xff] %vm397, %v838
      %923 = vst.msk [vmem:[#allocation2 + $0x1f0] sm:$0xff] %vm397, %v840
      %924 = vst.msk [vmem:[#allocation2 + $0x218] sm:$0xff] %vm397, %v842
      %925 = vst.msk [vmem:[#allocation2 + $0x240] sm:$0xff] %vm397, %v844
      %926 = vst.msk [vmem:[#allocation2 + $0x268] sm:$0xff] %vm397, %v846
      %927 = vst.msk [vmem:[#allocation2 + $0x290] sm:$0xff] %vm397, %v848
      %928 = vst.msk [vmem:[#allocation2 + $0x2b8] sm:$0xff] %vm397, %v850
      %929 = vst.msk [vmem:[#allocation2 + $0x2e0] sm:$0xff] %vm397, %v852
      %930 = vst.msk [vmem:[#allocation2 + $0x308] sm:$0xff] %vm397, %v854
      %931 = vst.msk [vmem:[#allocation2 + $0x330] sm:$0xff] %vm397, %v856
      %932 = vst.msk [vmem:[#allocation2 + $0x358] sm:$0xff] %vm397, %v858
      %933 = vst.msk [vmem:[#allocation2 + $0x380] sm:$0xff] %vm397, %v860
      %934 = vst.msk [vmem:[#allocation2 + $0x3a8] sm:$0xff] %vm397, %v862
      %935 = vst.msk [vmem:[#allocation2 + $0x3d0] sm:$0xff] %vm397, %v864
      %936 = vst.msk [vmem:[#allocation2 + $0x3f8] sm:$0xff] %vm397, %v866
      %937 = vst.msk [vmem:[#allocation2 + $0x420] sm:$0xff] %vm397, %v868
      %938 = vst.msk [vmem:[#allocation2 + $0x448] sm:$0xff] %vm397, %v870
      %939 = vst.msk [vmem:[#allocation2 + $0x470] sm:$0xff] %vm397, %v872
      %940 = vst.msk [vmem:[#allocation2 + $0x498] sm:$0xff] %vm397, %v874
      %941 = vst.msk [vmem:[#allocation2 + $0x4c0] sm:$0xff] %vm397, %v876
      %942 = vst.msk [vmem:[#allocation2 + $0x4e8] sm:$0xff] %vm397, %v878
      %s943 = scalar_lea.vmem %s165, 48
      %v944 = vld [vmem:[%s943] sm:$0xff]
      %v945 = vld [vmem:[%s943 + $0x8] sm:$0xff]
      %v946 = vld [vmem:[%s943 + $0x18] sm:$0xff]
      %v947 = vld [vmem:[%s943 + $0x20] sm:$0xff]
      %v948 = vld [vmem:[%s943 + $0x30] sm:$0xff]
      %v949 = vld [vmem:[%s943 + $0x38] sm:$0xff]
      %v950 = vld [vmem:[%s943 + $0x48] sm:$0xff]
      %v951 = vld [vmem:[%s943 + $0x50] sm:$0xff]
      %v952 = vld [vmem:[%s943 + $0x60] sm:$0xff]
      %v953 = vld [vmem:[%s943 + $0x68] sm:$0xff]
      %v954 = vld [vmem:[%s943 + $0x78] sm:$0xff]
      %v955 = vld [vmem:[%s943 + $0x80] sm:$0xff]
      %v956 = vld [vmem:[%s943 + $0x90] sm:$0xff]
      %v957 = vld [vmem:[%s943 + $0x98] sm:$0xff]
      %v958 = vld [vmem:[%s943 + $0xa8] sm:$0xff]
      %v959 = vld [vmem:[%s943 + $0xb0] sm:$0xff]
      %v960 = vld [vmem:[%s943 + $0xc0] sm:$0xff]
      %v961 = vld [vmem:[%s943 + $0xc8] sm:$0xff]
      %v962 = vld [vmem:[%s943 + $0xd8] sm:$0xff]
      %v963 = vld [vmem:[%s943 + $0xe0] sm:$0xff]
      %v964 = vld [vmem:[%s943 + $0xf0] sm:$0xff]
      %v965 = vld [vmem:[%s943 + $0xf8] sm:$0xff]
      %v966 = vld [vmem:[%s943 + $0x108] sm:$0xff]
      %v967 = vld [vmem:[%s943 + $0x110] sm:$0xff]
      %v968 = vld [vmem:[%s943 + $0x120] sm:$0xff]
      %v969 = vld [vmem:[%s943 + $0x128] sm:$0xff]
      %v970 = vld [vmem:[%s943 + $0x138] sm:$0xff]
      %v971 = vld [vmem:[%s943 + $0x140] sm:$0xff]
      %v972 = vld [vmem:[%s943 + $0x150] sm:$0xff]
      %v973 = vld [vmem:[%s943 + $0x158] sm:$0xff]
      %v974 = vld [vmem:[%s943 + $0x168] sm:$0xff]
      %v975 = vld [vmem:[%s943 + $0x170] sm:$0xff]
      %976 = vst.msk [vmem:[#allocation2 + $0x18] sm:$0xff] %vm204, %v944
      %977 = vst.msk [vmem:[#allocation2 + $0x40] sm:$0xff] %vm204, %v945
      %978 = vst.msk [vmem:[#allocation2 + $0x68] sm:$0xff] %vm204, %v946
      %979 = vst.msk [vmem:[#allocation2 + $0x90] sm:$0xff] %vm204, %v947
      %980 = vst.msk [vmem:[#allocation2 + $0xb8] sm:$0xff] %vm204, %v948
      %981 = vst.msk [vmem:[#allocation2 + $0xe0] sm:$0xff] %vm204, %v949
      %982 = vst.msk [vmem:[#allocation2 + $0x108] sm:$0xff] %vm204, %v950
      %983 = vst.msk [vmem:[#allocation2 + $0x130] sm:$0xff] %vm204, %v951
      %984 = vst.msk [vmem:[#allocation2 + $0x158] sm:$0xff] %vm204, %v952
      %985 = vst.msk [vmem:[#allocation2 + $0x180] sm:$0xff] %vm204, %v953
      %986 = vst.msk [vmem:[#allocation2 + $0x1a8] sm:$0xff] %vm204, %v954
      %987 = vst.msk [vmem:[#allocation2 + $0x1d0] sm:$0xff] %vm204, %v955
      %988 = vst.msk [vmem:[#allocation2 + $0x1f8] sm:$0xff] %vm204, %v956
      %989 = vst.msk [vmem:[#allocation2 + $0x220] sm:$0xff] %vm204, %v957
      %990 = vst.msk [vmem:[#allocation2 + $0x248] sm:$0xff] %vm204, %v958
      %991 = vst.msk [vmem:[#allocation2 + $0x270] sm:$0xff] %vm204, %v959
      %992 = vst.msk [vmem:[#allocation2 + $0x298] sm:$0xff] %vm204, %v960
      %993 = vst.msk [vmem:[#allocation2 + $0x2c0] sm:$0xff] %vm204, %v961
      %994 = vst.msk [vmem:[#allocation2 + $0x2e8] sm:$0xff] %vm204, %v962
      %995 = vst.msk [vmem:[#allocation2 + $0x310] sm:$0xff] %vm204, %v963
      %996 = vst.msk [vmem:[#allocation2 + $0x338] sm:$0xff] %vm204, %v964
      %997 = vst.msk [vmem:[#allocation2 + $0x360] sm:$0xff] %vm204, %v965
      %998 = vst.msk [vmem:[#allocation2 + $0x388] sm:$0xff] %vm204, %v966
      %999 = vst.msk [vmem:[#allocation2 + $0x3b0] sm:$0xff] %vm204, %v967
      %1000 = vst.msk [vmem:[#allocation2 + $0x3d8] sm:$0xff] %vm204, %v968
      %1001 = vst.msk [vmem:[#allocation2 + $0x400] sm:$0xff] %vm204, %v969
      %1002 = vst.msk [vmem:[#allocation2 + $0x428] sm:$0xff] %vm204, %v970
      %1003 = vst.msk [vmem:[#allocation2 + $0x450] sm:$0xff] %vm204, %v971
      %1004 = vst.msk [vmem:[#allocation2 + $0x478] sm:$0xff] %vm204, %v972
      %1005 = vst.msk [vmem:[#allocation2 + $0x4a0] sm:$0xff] %vm204, %v973
      %1006 = vst.msk [vmem:[#allocation2 + $0x4c8] sm:$0xff] %vm204, %v974
      %1007 = vst.msk [vmem:[#allocation2 + $0x4f0] sm:$0xff] %vm204, %v975
      %v1008 = vld [vmem:[%s943 + $0x1] sm:$0xff]
      %v1009 = vld [vmem:[%s943 + $0x9] sm:$0xff]
      %v1010 = vld [vmem:[%s943 + $0x19] sm:$0xff]
      %v1011 = vld [vmem:[%s943 + $0x21] sm:$0xff]
      %v1012 = vld [vmem:[%s943 + $0x31] sm:$0xff]
      %v1013 = vld [vmem:[%s943 + $0x39] sm:$0xff]
      %v1014 = vld [vmem:[%s943 + $0x49] sm:$0xff]
      %v1015 = vld [vmem:[%s943 + $0x51] sm:$0xff]
      %v1016 = vld [vmem:[%s943 + $0x61] sm:$0xff]
      %v1017 = vld [vmem:[%s943 + $0x69] sm:$0xff]
      %v1018 = vld [vmem:[%s943 + $0x79] sm:$0xff]
      %v1019 = vld [vmem:[%s943 + $0x81] sm:$0xff]
      %v1020 = vld [vmem:[%s943 + $0x91] sm:$0xff]
      %v1021 = vld [vmem:[%s943 + $0x99] sm:$0xff]
      %v1022 = vld [vmem:[%s943 + $0xa9] sm:$0xff]
      %v1023 = vld [vmem:[%s943 + $0xb1] sm:$0xff]
      %v1024 = vld [vmem:[%s943 + $0xc1] sm:$0xff]
      %v1025 = vld [vmem:[%s943 + $0xc9] sm:$0xff]
      %v1026 = vld [vmem:[%s943 + $0xd9] sm:$0xff]
      %v1027 = vld [vmem:[%s943 + $0xe1] sm:$0xff]
      %v1028 = vld [vmem:[%s943 + $0xf1] sm:$0xff]
      %v1029 = vld [vmem:[%s943 + $0xf9] sm:$0xff]
      %v1030 = vld [vmem:[%s943 + $0x109] sm:$0xff]
      %v1031 = vld [vmem:[%s943 + $0x111] sm:$0xff]
      %v1032 = vld [vmem:[%s943 + $0x121] sm:$0xff]
      %v1033 = vld [vmem:[%s943 + $0x129] sm:$0xff]
      %v1034 = vld [vmem:[%s943 + $0x139] sm:$0xff]
      %v1035 = vld [vmem:[%s943 + $0x141] sm:$0xff]
      %v1036 = vld [vmem:[%s943 + $0x151] sm:$0xff]
      %v1037 = vld [vmem:[%s943 + $0x159] sm:$0xff]
      %v1038 = vld [vmem:[%s943 + $0x169] sm:$0xff]
      %v1039 = vld [vmem:[%s943 + $0x171] sm:$0xff]
      %1072 = vrot.lane.b32.xlu0 %v1008, 64
      %v1073 = vpop.permute.xlu0 %1072
      %1074 = vrot.lane.b32.xlu0 %v1009, 64
      %v1075 = vpop.permute.xlu0 %1074
      %1076 = vrot.lane.b32.xlu0 %v1010, 64
      %v1077 = vpop.permute.xlu0 %1076
      %1078 = vrot.lane.b32.xlu0 %v1011, 64
      %v1079 = vpop.permute.xlu0 %1078
      %1080 = vrot.lane.b32.xlu0 %v1012, 64
      %v1081 = vpop.permute.xlu0 %1080
      %1082 = vrot.lane.b32.xlu0 %v1013, 64
      %v1083 = vpop.permute.xlu0 %1082
      %1084 = vrot.lane.b32.xlu0 %v1014, 64
      %v1085 = vpop.permute.xlu0 %1084
      %1086 = vrot.lane.b32.xlu0 %v1015, 64
      %v1087 = vpop.permute.xlu0 %1086
      %1088 = vrot.lane.b32.xlu0 %v1016, 64
      %v1089 = vpop.permute.xlu0 %1088
      %1090 = vrot.lane.b32.xlu0 %v1017, 64
      %v1091 = vpop.permute.xlu0 %1090
      %1092 = vrot.lane.b32.xlu0 %v1018, 64
      %v1093 = vpop.permute.xlu0 %1092
      %1094 = vrot.lane.b32.xlu0 %v1019, 64
      %v1095 = vpop.permute.xlu0 %1094
      %1096 = vrot.lane.b32.xlu0 %v1020, 64
      %v1097 = vpop.permute.xlu0 %1096
      %1098 = vrot.lane.b32.xlu0 %v1021, 64
      %v1099 = vpop.permute.xlu0 %1098
      %1100 = vrot.lane.b32.xlu0 %v1022, 64
      %v1101 = vpop.permute.xlu0 %1100
      %1102 = vrot.lane.b32.xlu0 %v1023, 64
      %v1103 = vpop.permute.xlu0 %1102
      %1104 = vrot.lane.b32.xlu0 %v1024, 64
      %v1105 = vpop.permute.xlu0 %1104
      %1106 = vrot.lane.b32.xlu0 %v1025, 64
      %v1107 = vpop.permute.xlu0 %1106
      %1108 = vrot.lane.b32.xlu0 %v1026, 64
      %v1109 = vpop.permute.xlu0 %1108
      %1110 = vrot.lane.b32.xlu0 %v1027, 64
      %v1111 = vpop.permute.xlu0 %1110
      %1112 = vrot.lane.b32.xlu0 %v1028, 64
      %v1113 = vpop.permute.xlu0 %1112
      %1114 = vrot.lane.b32.xlu0 %v1029, 64
      %v1115 = vpop.permute.xlu0 %1114
      %1116 = vrot.lane.b32.xlu0 %v1030, 64
      %v1117 = vpop.permute.xlu0 %1116
      %1118 = vrot.lane.b32.xlu0 %v1031, 64
      %v1119 = vpop.permute.xlu0 %1118
      %1120 = vrot.lane.b32.xlu0 %v1032, 64
      %v1121 = vpop.permute.xlu0 %1120
      %1122 = vrot.lane.b32.xlu0 %v1033, 64
      %v1123 = vpop.permute.xlu0 %1122
      %1124 = vrot.lane.b32.xlu0 %v1034, 64
      %v1125 = vpop.permute.xlu0 %1124
      %1126 = vrot.lane.b32.xlu0 %v1035, 64
      %v1127 = vpop.permute.xlu0 %1126
      %1128 = vrot.lane.b32.xlu0 %v1036, 64
      %v1129 = vpop.permute.xlu0 %1128
      %1130 = vrot.lane.b32.xlu0 %v1037, 64
      %v1131 = vpop.permute.xlu0 %1130
      %1132 = vrot.lane.b32.xlu0 %v1038, 64
      %v1133 = vpop.permute.xlu0 %1132
      %1134 = vrot.lane.b32.xlu0 %v1039, 64
      %v1135 = vpop.permute.xlu0 %1134
      %1168 = vst.msk [vmem:[#allocation2 + $0x18] sm:$0xff] %vm397, %v1073
      %1169 = vst.msk [vmem:[#allocation2 + $0x40] sm:$0xff] %vm397, %v1075
      %1170 = vst.msk [vmem:[#allocation2 + $0x68] sm:$0xff] %vm397, %v1077
      %1171 = vst.msk [vmem:[#allocation2 + $0x90] sm:$0xff] %vm397, %v1079
      %1172 = vst.msk [vmem:[#allocation2 + $0xb8] sm:$0xff] %vm397, %v1081
      %1173 = vst.msk [vmem:[#allocation2 + $0xe0] sm:$0xff] %vm397, %v1083
      %1174 = vst.msk [vmem:[#allocation2 + $0x108] sm:$0xff] %vm397, %v1085
      %1175 = vst.msk [vmem:[#allocation2 + $0x130] sm:$0xff] %vm397, %v1087
      %1176 = vst.msk [vmem:[#allocation2 + $0x158] sm:$0xff] %vm397, %v1089
      %1177 = vst.msk [vmem:[#allocation2 + $0x180] sm:$0xff] %vm397, %v1091
      %1178 = vst.msk [vmem:[#allocation2 + $0x1a8] sm:$0xff] %vm397, %v1093
      %1179 = vst.msk [vmem:[#allocation2 + $0x1d0] sm:$0xff] %vm397, %v1095
      %1180 = vst.msk [vmem:[#allocation2 + $0x1f8] sm:$0xff] %vm397, %v1097
      %1181 = vst.msk [vmem:[#allocation2 + $0x220] sm:$0xff] %vm397, %v1099
      %1182 = vst.msk [vmem:[#allocation2 + $0x248] sm:$0xff] %vm397, %v1101
      %1183 = vst.msk [vmem:[#allocation2 + $0x270] sm:$0xff] %vm397, %v1103
      %1184 = vst.msk [vmem:[#allocation2 + $0x298] sm:$0xff] %vm397, %v1105
      %1185 = vst.msk [vmem:[#allocation2 + $0x2c0] sm:$0xff] %vm397, %v1107
      %1186 = vst.msk [vmem:[#allocation2 + $0x2e8] sm:$0xff] %vm397, %v1109
      %1187 = vst.msk [vmem:[#allocation2 + $0x310] sm:$0xff] %vm397, %v1111
      %1188 = vst.msk [vmem:[#allocation2 + $0x338] sm:$0xff] %vm397, %v1113
      %1189 = vst.msk [vmem:[#allocation2 + $0x360] sm:$0xff] %vm397, %v1115
      %1190 = vst.msk [vmem:[#allocation2 + $0x388] sm:$0xff] %vm397, %v1117
      %1191 = vst.msk [vmem:[#allocation2 + $0x3b0] sm:$0xff] %vm397, %v1119
      %1192 = vst.msk [vmem:[#allocation2 + $0x3d8] sm:$0xff] %vm397, %v1121
      %1193 = vst.msk [vmem:[#allocation2 + $0x400] sm:$0xff] %vm397, %v1123
      %1194 = vst.msk [vmem:[#allocation2 + $0x428] sm:$0xff] %vm397, %v1125
      %1195 = vst.msk [vmem:[#allocation2 + $0x450] sm:$0xff] %vm397, %v1127
      %1196 = vst.msk [vmem:[#allocation2 + $0x478] sm:$0xff] %vm397, %v1129
      %1197 = vst.msk [vmem:[#allocation2 + $0x4a0] sm:$0xff] %vm397, %v1131
      %1198 = vst.msk [vmem:[#allocation2 + $0x4c8] sm:$0xff] %vm397, %v1133
      %1199 = vst.msk [vmem:[#allocation2 + $0x4f0] sm:$0xff] %vm397, %v1135
      %v1200 = vld [vmem:[%s943 + $0x2] sm:$0xff]
      %v1201 = vld [vmem:[%s943 + $0xa] sm:$0xff]
      %v1202 = vld [vmem:[%s943 + $0x1a] sm:$0xff]
      %v1203 = vld [vmem:[%s943 + $0x22] sm:$0xff]
      %v1204 = vld [vmem:[%s943 + $0x32] sm:$0xff]
      %v1205 = vld [vmem:[%s943 + $0x3a] sm:$0xff]
      %v1206 = vld [vmem:[%s943 + $0x4a] sm:$0xff]
      %v1207 = vld [vmem:[%s943 + $0x52] sm:$0xff]
      %v1208 = vld [vmem:[%s943 + $0x62] sm:$0xff]
      %v1209 = vld [vmem:[%s943 + $0x6a] sm:$0xff]
      %v1210 = vld [vmem:[%s943 + $0x7a] sm:$0xff]
      %v1211 = vld [vmem:[%s943 + $0x82] sm:$0xff]
      %v1212 = vld [vmem:[%s943 + $0x92] sm:$0xff]
      %v1213 = vld [vmem:[%s943 + $0x9a] sm:$0xff]
      %v1214 = vld [vmem:[%s943 + $0xaa] sm:$0xff]
      %v1215 = vld [vmem:[%s943 + $0xb2] sm:$0xff]
      %v1216 = vld [vmem:[%s943 + $0xc2] sm:$0xff]
      %v1217 = vld [vmem:[%s943 + $0xca] sm:$0xff]
      %v1218 = vld [vmem:[%s943 + $0xda] sm:$0xff]
      %v1219 = vld [vmem:[%s943 + $0xe2] sm:$0xff]
      %v1220 = vld [vmem:[%s943 + $0xf2] sm:$0xff]
      %v1221 = vld [vmem:[%s943 + $0xfa] sm:$0xff]
      %v1222 = vld [vmem:[%s943 + $0x10a] sm:$0xff]
      %v1223 = vld [vmem:[%s943 + $0x112] sm:$0xff]
      %v1224 = vld [vmem:[%s943 + $0x122] sm:$0xff]
      %v1225 = vld [vmem:[%s943 + $0x12a] sm:$0xff]
      %v1226 = vld [vmem:[%s943 + $0x13a] sm:$0xff]
      %v1227 = vld [vmem:[%s943 + $0x142] sm:$0xff]
      %v1228 = vld [vmem:[%s943 + $0x152] sm:$0xff]
      %v1229 = vld [vmem:[%s943 + $0x15a] sm:$0xff]
      %v1230 = vld [vmem:[%s943 + $0x16a] sm:$0xff]
      %v1231 = vld [vmem:[%s943 + $0x172] sm:$0xff]
      %1232 = vst.msk [vmem:[#allocation2 + $0x20] sm:$0xff] %vm204, %v1200
      %1233 = vst.msk [vmem:[#allocation2 + $0x48] sm:$0xff] %vm204, %v1201
      %1234 = vst.msk [vmem:[#allocation2 + $0x70] sm:$0xff] %vm204, %v1202
      %1235 = vst.msk [vmem:[#allocation2 + $0x98] sm:$0xff] %vm204, %v1203
      %1236 = vst.msk [vmem:[#allocation2 + $0xc0] sm:$0xff] %vm204, %v1204
      %1237 = vst.msk [vmem:[#allocation2 + $0xe8] sm:$0xff] %vm204, %v1205
      %1238 = vst.msk [vmem:[#allocation2 + $0x110] sm:$0xff] %vm204, %v1206
      %1239 = vst.msk [vmem:[#allocation2 + $0x138] sm:$0xff] %vm204, %v1207
      %1240 = vst.msk [vmem:[#allocation2 + $0x160] sm:$0xff] %vm204, %v1208
      %1241 = vst.msk [vmem:[#allocation2 + $0x188] sm:$0xff] %vm204, %v1209
      %1242 = vst.msk [vmem:[#allocation2 + $0x1b0] sm:$0xff] %vm204, %v1210
      %1243 = vst.msk [vmem:[#allocation2 + $0x1d8] sm:$0xff] %vm204, %v1211
      %1244 = vst.msk [vmem:[#allocation2 + $0x200] sm:$0xff] %vm204, %v1212
      %1245 = vst.msk [vmem:[#allocation2 + $0x228] sm:$0xff] %vm204, %v1213
      %1246 = vst.msk [vmem:[#allocation2 + $0x250] sm:$0xff] %vm204, %v1214
      %1247 = vst.msk [vmem:[#allocation2 + $0x278] sm:$0xff] %vm204, %v1215
      %1248 = vst.msk [vmem:[#allocation2 + $0x2a0] sm:$0xff] %vm204, %v1216
      %1249 = vst.msk [vmem:[#allocation2 + $0x2c8] sm:$0xff] %vm204, %v1217
      %1250 = vst.msk [vmem:[#allocation2 + $0x2f0] sm:$0xff] %vm204, %v1218
      %1251 = vst.msk [vmem:[#allocation2 + $0x318] sm:$0xff] %vm204, %v1219
      %1252 = vst.msk [vmem:[#allocation2 + $0x340] sm:$0xff] %vm204, %v1220
      %1253 = vst.msk [vmem:[#allocation2 + $0x368] sm:$0xff] %vm204, %v1221
      %1254 = vst.msk [vmem:[#allocation2 + $0x390] sm:$0xff] %vm204, %v1222
      %1255 = vst.msk [vmem:[#allocation2 + $0x3b8] sm:$0xff] %vm204, %v1223
      %1256 = vst.msk [vmem:[#allocation2 + $0x3e0] sm:$0xff] %vm204, %v1224
      %1257 = vst.msk [vmem:[#allocation2 + $0x408] sm:$0xff] %vm204, %v1225
      %1258 = vst.msk [vmem:[#allocation2 + $0x430] sm:$0xff] %vm204, %v1226
      %1259 = vst.msk [vmem:[#allocation2 + $0x458] sm:$0xff] %vm204, %v1227
      %1260 = vst.msk [vmem:[#allocation2 + $0x480] sm:$0xff] %vm204, %v1228
      %1261 = vst.msk [vmem:[#allocation2 + $0x4a8] sm:$0xff] %vm204, %v1229
      %1262 = vst.msk [vmem:[#allocation2 + $0x4d0] sm:$0xff] %vm204, %v1230
      %1263 = vst.msk [vmem:[#allocation2 + $0x4f8] sm:$0xff] %vm204, %v1231
      %v1264 = vld [vmem:[#allocation2] sm:$0xff]
      %v1265 = vld [vmem:[#allocation2 + $0x8] sm:$0xff]
      %v1266 = vld [vmem:[#allocation2 + $0x10] sm:$0xff]
      %v1267 = vld [vmem:[#allocation2 + $0x18] sm:$0xff]
      %v1268 = vld [vmem:[#allocation2 + $0x20] sm:$0xff]
      %v1269 = vld [vmem:[#allocation2 + $0x28] sm:$0xff]
      %v1270 = vld [vmem:[#allocation2 + $0x30] sm:$0xff]
      %v1271 = vld [vmem:[#allocation2 + $0x38] sm:$0xff]
      %v1272 = vld [vmem:[#allocation2 + $0x40] sm:$0xff]
      %v1273 = vld [vmem:[#allocation2 + $0x48] sm:$0xff]
      %v1274 = vld [vmem:[#allocation2 + $0x50] sm:$0xff]
      %v1275 = vld [vmem:[#allocation2 + $0x58] sm:$0xff]
      %v1276 = vld [vmem:[#allocation2 + $0x60] sm:$0xff]
      %v1277 = vld [vmem:[#allocation2 + $0x68] sm:$0xff]
      %v1278 = vld [vmem:[#allocation2 + $0x70] sm:$0xff]
      %v1279 = vld [vmem:[#allocation2 + $0x78] sm:$0xff]
      %v1280 = vld [vmem:[#allocation2 + $0x80] sm:$0xff]
      %v1281 = vld [vmem:[#allocation2 + $0x88] sm:$0xff]
      %v1282 = vld [vmem:[#allocation2 + $0x90] sm:$0xff]
      %v1283 = vld [vmem:[#allocation2 + $0x98] sm:$0xff]
      %v1284 = vld [vmem:[#allocation2 + $0xa0] sm:$0xff]
      %v1285 = vld [vmem:[#allocation2 + $0xa8] sm:$0xff]
      %v1286 = vld [vmem:[#allocation2 + $0xb0] sm:$0xff]
      %v1287 = vld [vmem:[#allocation2 + $0xb8] sm:$0xff]
      %v1288 = vld [vmem:[#allocation2 + $0xc0] sm:$0xff]
      %v1289 = vld [vmem:[#allocation2 + $0xc8] sm:$0xff]
      %v1290 = vld [vmem:[#allocation2 + $0xd0] sm:$0xff]
      %v1291 = vld [vmem:[#allocation2 + $0xd8] sm:$0xff]
      %v1292 = vld [vmem:[#allocation2 + $0xe0] sm:$0xff]
      %v1293 = vld [vmem:[#allocation2 + $0xe8] sm:$0xff]
      %v1294 = vld [vmem:[#allocation2 + $0xf0] sm:$0xff]
      %v1295 = vld [vmem:[#allocation2 + $0xf8] sm:$0xff]
      %v1296 = vld [vmem:[#allocation2 + $0x100] sm:$0xff]
      %v1297 = vld [vmem:[#allocation2 + $0x108] sm:$0xff]
      %v1298 = vld [vmem:[#allocation2 + $0x110] sm:$0xff]
      %v1299 = vld [vmem:[#allocation2 + $0x118] sm:$0xff]
      %v1300 = vld [vmem:[#allocation2 + $0x120] sm:$0xff]
      %v1301 = vld [vmem:[#allocation2 + $0x128] sm:$0xff]
      %v1302 = vld [vmem:[#allocation2 + $0x130] sm:$0xff]
      %v1303 = vld [vmem:[#allocation2 + $0x138] sm:$0xff]
      %v1304 = vld [vmem:[#allocation2 + $0x140] sm:$0xff]
      %v1305 = vld [vmem:[#allocation2 + $0x148] sm:$0xff]
      %v1306 = vld [vmem:[#allocation2 + $0x150] sm:$0xff]
      %v1307 = vld [vmem:[#allocation2 + $0x158] sm:$0xff]
      %v1308 = vld [vmem:[#allocation2 + $0x160] sm:$0xff]
      %v1309 = vld [vmem:[#allocation2 + $0x168] sm:$0xff]
      %v1310 = vld [vmem:[#allocation2 + $0x170] sm:$0xff]
      %v1311 = vld [vmem:[#allocation2 + $0x178] sm:$0xff]
      %v1312 = vld [vmem:[#allocation2 + $0x180] sm:$0xff]
      %v1313 = vld [vmem:[#allocation2 + $0x188] sm:$0xff]
      %v1314 = vld [vmem:[#allocation2 + $0x190] sm:$0xff]
      %v1315 = vld [vmem:[#allocation2 + $0x198] sm:$0xff]
      %v1316 = vld [vmem:[#allocation2 + $0x1a0] sm:$0xff]
      %v1317 = vld [vmem:[#allocation2 + $0x1a8] sm:$0xff]
      %v1318 = vld [vmem:[#allocation2 + $0x1b0] sm:$0xff]
      %v1319 = vld [vmem:[#allocation2 + $0x1b8] sm:$0xff]
      %v1320 = vld [vmem:[#allocation2 + $0x1c0] sm:$0xff]
      %v1321 = vld [vmem:[#allocation2 + $0x1c8] sm:$0xff]
      %v1322 = vld [vmem:[#allocation2 + $0x1d0] sm:$0xff]
      %v1323 = vld [vmem:[#allocation2 + $0x1d8] sm:$0xff]
      %v1324 = vld [vmem:[#allocation2 + $0x1e0] sm:$0xff]
      %v1325 = vld [vmem:[#allocation2 + $0x1e8] sm:$0xff]
      %v1326 = vld [vmem:[#allocation2 + $0x1f0] sm:$0xff]
      %v1327 = vld [vmem:[#allocation2 + $0x1f8] sm:$0xff]
      %v1328 = vld [vmem:[#allocation2 + $0x200] sm:$0xff]
      %v1329 = vld [vmem:[#allocation2 + $0x208] sm:$0xff]
      %v1330 = vld [vmem:[#allocation2 + $0x210] sm:$0xff]
      %v1331 = vld [vmem:[#allocation2 + $0x218] sm:$0xff]
      %v1332 = vld [vmem:[#allocation2 + $0x220] sm:$0xff]
      %v1333 = vld [vmem:[#allocation2 + $0x228] sm:$0xff]
      %v1334 = vld [vmem:[#allocation2 + $0x230] sm:$0xff]
      %v1335 = vld [vmem:[#allocation2 + $0x238] sm:$0xff]
      %v1336 = vld [vmem:[#allocation2 + $0x240] sm:$0xff]
      %v1337 = vld [vmem:[#allocation2 + $0x248] sm:$0xff]
      %v1338 = vld [vmem:[#allocation2 + $0x250] sm:$0xff]
      %v1339 = vld [vmem:[#allocation2 + $0x258] sm:$0xff]
      %v1340 = vld [vmem:[#allocation2 + $0x260] sm:$0xff]
      %v1341 = vld [vmem:[#allocation2 + $0x268] sm:$0xff]
      %v1342 = vld [vmem:[#allocation2 + $0x270] sm:$0xff]
      %v1343 = vld [vmem:[#allocation2 + $0x278] sm:$0xff]
      %v1344 = vld [vmem:[#allocation2 + $0x280] sm:$0xff]
      %v1345 = vld [vmem:[#allocation2 + $0x288] sm:$0xff]
      %v1346 = vld [vmem:[#allocation2 + $0x290] sm:$0xff]
      %v1347 = vld [vmem:[#allocation2 + $0x298] sm:$0xff]
      %v1348 = vld [vmem:[#allocation2 + $0x2a0] sm:$0xff]
      %v1349 = vld [vmem:[#allocation2 + $0x2a8] sm:$0xff]
      %v1350 = vld [vmem:[#allocation2 + $0x2b0] sm:$0xff]
      %v1351 = vld [vmem:[#allocation2 + $0x2b8] sm:$0xff]
      %v1352 = vld [vmem:[#allocation2 + $0x2c0] sm:$0xff]
      %v1353 = vld [vmem:[#allocation2 + $0x2c8] sm:$0xff]
      %v1354 = vld [vmem:[#allocation2 + $0x2d0] sm:$0xff]
      %v1355 = vld [vmem:[#allocation2 + $0x2d8] sm:$0xff]
      %v1356 = vld [vmem:[#allocation2 + $0x2e0] sm:$0xff]
      %v1357 = vld [vmem:[#allocation2 + $0x2e8] sm:$0xff]
      %v1358 = vld [vmem:[#allocation2 + $0x2f0] sm:$0xff]
      %v1359 = vld [vmem:[#allocation2 + $0x2f8] sm:$0xff]
      %v1360 = vld [vmem:[#allocation2 + $0x300] sm:$0xff]
      %v1361 = vld [vmem:[#allocation2 + $0x308] sm:$0xff]
      %v1362 = vld [vmem:[#allocation2 + $0x310] sm:$0xff]
      %v1363 = vld [vmem:[#allocation2 + $0x318] sm:$0xff]
      %v1364 = vld [vmem:[#allocation2 + $0x320] sm:$0xff]
      %v1365 = vld [vmem:[#allocation2 + $0x328] sm:$0xff]
      %v1366 = vld [vmem:[#allocation2 + $0x330] sm:$0xff]
      %v1367 = vld [vmem:[#allocation2 + $0x338] sm:$0xff]
      %v1368 = vld [vmem:[#allocation2 + $0x340] sm:$0xff]
      %v1369 = vld [vmem:[#allocation2 + $0x348] sm:$0xff]
      %v1370 = vld [vmem:[#allocation2 + $0x350] sm:$0xff]
      %v1371 = vld [vmem:[#allocation2 + $0x358] sm:$0xff]
      %v1372 = vld [vmem:[#allocation2 + $0x360] sm:$0xff]
      %v1373 = vld [vmem:[#allocation2 + $0x368] sm:$0xff]
      %v1374 = vld [vmem:[#allocation2 + $0x370] sm:$0xff]
      %v1375 = vld [vmem:[#allocation2 + $0x378] sm:$0xff]
      %v1376 = vld [vmem:[#allocation2 + $0x380] sm:$0xff]
      %v1377 = vld [vmem:[#allocation2 + $0x388] sm:$0xff]
      %v1378 = vld [vmem:[#allocation2 + $0x390] sm:$0xff]
      %v1379 = vld [vmem:[#allocation2 + $0x398] sm:$0xff]
      %v1380 = vld [vmem:[#allocation2 + $0x3a0] sm:$0xff]
      %v1381 = vld [vmem:[#allocation2 + $0x3a8] sm:$0xff]
      %v1382 = vld [vmem:[#allocation2 + $0x3b0] sm:$0xff]
      %v1383 = vld [vmem:[#allocation2 + $0x3b8] sm:$0xff]
      %v1384 = vld [vmem:[#allocation2 + $0x3c0] sm:$0xff]
      %v1385 = vld [vmem:[#allocation2 + $0x3c8] sm:$0xff]
      %v1386 = vld [vmem:[#allocation2 + $0x3d0] sm:$0xff]
      %v1387 = vld [vmem:[#allocation2 + $0x3d8] sm:$0xff]
      %v1388 = vld [vmem:[#allocation2 + $0x3e0] sm:$0xff]
      %v1389 = vld [vmem:[#allocation2 + $0x3e8] sm:$0xff]
      %v1390 = vld [vmem:[#allocation2 + $0x3f0] sm:$0xff]
      %v1391 = vld [vmem:[#allocation2 + $0x3f8] sm:$0xff]
      %v1392 = vld [vmem:[#allocation2 + $0x400] sm:$0xff]
      %v1393 = vld [vmem:[#allocation2 + $0x408] sm:$0xff]
      %v1394 = vld [vmem:[#allocation2 + $0x410] sm:$0xff]
      %v1395 = vld [vmem:[#allocation2 + $0x418] sm:$0xff]
      %v1396 = vld [vmem:[#allocation2 + $0x420] sm:$0xff]
      %v1397 = vld [vmem:[#allocation2 + $0x428] sm:$0xff]
      %v1398 = vld [vmem:[#allocation2 + $0x430] sm:$0xff]
      %v1399 = vld [vmem:[#allocation2 + $0x438] sm:$0xff]
      %v1400 = vld [vmem:[#allocation2 + $0x440] sm:$0xff]
      %v1401 = vld [vmem:[#allocation2 + $0x448] sm:$0xff]
      %v1402 = vld [vmem:[#allocation2 + $0x450] sm:$0xff]
      %v1403 = vld [vmem:[#allocation2 + $0x458] sm:$0xff]
      %v1404 = vld [vmem:[#allocation2 + $0x460] sm:$0xff]
      %v1405 = vld [vmem:[#allocation2 + $0x468] sm:$0xff]
      %v1406 = vld [vmem:[#allocation2 + $0x470] sm:$0xff]
      %v1407 = vld [vmem:[#allocation2 + $0x478] sm:$0xff]
      %v1408 = vld [vmem:[#allocation2 + $0x480] sm:$0xff]
      %v1409 = vld [vmem:[#allocation2 + $0x488] sm:$0xff]
      %v1410 = vld [vmem:[#allocation2 + $0x490] sm:$0xff]
      %v1411 = vld [vmem:[#allocation2 + $0x498] sm:$0xff]
      %v1412 = vld [vmem:[#allocation2 + $0x4a0] sm:$0xff]
      %v1413 = vld [vmem:[#allocation2 + $0x4a8] sm:$0xff]
      %v1414 = vld [vmem:[#allocation2 + $0x4b0] sm:$0xff]
      %v1415 = vld [vmem:[#allocation2 + $0x4b8] sm:$0xff]
      %v1416 = vld [vmem:[#allocation2 + $0x4c0] sm:$0xff]
      %v1417 = vld [vmem:[#allocation2 + $0x4c8] sm:$0xff]
      %v1418 = vld [vmem:[#allocation2 + $0x4d0] sm:$0xff]
      %v1419 = vld [vmem:[#allocation2 + $0x4d8] sm:$0xff]
      %v1420 = vld [vmem:[#allocation2 + $0x4e0] sm:$0xff]
      %v1421 = vld [vmem:[#allocation2 + $0x4e8] sm:$0xff]
      %v1422 = vld [vmem:[#allocation2 + $0x4f0] sm:$0xff]
      %v1423 = vld [vmem:[#allocation2 + $0x4f8] sm:$0xff]
      %v1424 = vpack.c.bf16 %v1269, %v1264
      %v1425 = vpack.c.bf16 %v1270, %v1265
      %v1426 = vpack.c.bf16 %v1271, %v1266
      %v1427 = vpack.c.bf16 %v1272, %v1267
      %v1428 = vpack.c.bf16 %v1273, %v1268
      %v1429 = vpack.c.bf16 %v1279, %v1274
      %v1430 = vpack.c.bf16 %v1280, %v1275
      %v1431 = vpack.c.bf16 %v1281, %v1276
      %v1432 = vpack.c.bf16 %v1282, %v1277
      %v1433 = vpack.c.bf16 %v1283, %v1278
      %v1434 = vpack.c.bf16 %v1289, %v1284
      %v1435 = vpack.c.bf16 %v1290, %v1285
      %v1436 = vpack.c.bf16 %v1291, %v1286
      %v1437 = vpack.c.bf16 %v1292, %v1287
      %v1438 = vpack.c.bf16 %v1293, %v1288
      %v1439 = vpack.c.bf16 %v1299, %v1294
      %v1440 = vpack.c.bf16 %v1300, %v1295
      %v1441 = vpack.c.bf16 %v1301, %v1296
      %v1442 = vpack.c.bf16 %v1302, %v1297
      %v1443 = vpack.c.bf16 %v1303, %v1298
      %v1444 = vpack.c.bf16 %v1309, %v1304
      %v1445 = vpack.c.bf16 %v1310, %v1305
      %v1446 = vpack.c.bf16 %v1311, %v1306
      %v1447 = vpack.c.bf16 %v1312, %v1307
      %v1448 = vpack.c.bf16 %v1313, %v1308
      %v1449 = vpack.c.bf16 %v1319, %v1314
      %v1450 = vpack.c.bf16 %v1320, %v1315
      %v1451 = vpack.c.bf16 %v1321, %v1316
      %v1452 = vpack.c.bf16 %v1322, %v1317
      %v1453 = vpack.c.bf16 %v1323, %v1318
      %v1454 = vpack.c.bf16 %v1329, %v1324
      %v1455 = vpack.c.bf16 %v1330, %v1325
      %v1456 = vpack.c.bf16 %v1331, %v1326
      %v1457 = vpack.c.bf16 %v1332, %v1327
      %v1458 = vpack.c.bf16 %v1333, %v1328
      %v1459 = vpack.c.bf16 %v1339, %v1334
      %v1460 = vpack.c.bf16 %v1340, %v1335
      %v1461 = vpack.c.bf16 %v1341, %v1336
      %v1462 = vpack.c.bf16 %v1342, %v1337
      %v1463 = vpack.c.bf16 %v1343, %v1338
      %v1464 = vpack.c.bf16 %v1349, %v1344
      %v1465 = vpack.c.bf16 %v1350, %v1345
      %v1466 = vpack.c.bf16 %v1351, %v1346
      %v1467 = vpack.c.bf16 %v1352, %v1347
      %v1468 = vpack.c.bf16 %v1353, %v1348
      %v1469 = vpack.c.bf16 %v1359, %v1354
      %v1470 = vpack.c.bf16 %v1360, %v1355
      %v1471 = vpack.c.bf16 %v1361, %v1356
      %v1472 = vpack.c.bf16 %v1362, %v1357
      %v1473 = vpack.c.bf16 %v1363, %v1358
      %v1474 = vpack.c.bf16 %v1369, %v1364
      %v1475 = vpack.c.bf16 %v1370, %v1365
      %v1476 = vpack.c.bf16 %v1371, %v1366
      %v1477 = vpack.c.bf16 %v1372, %v1367
      %v1478 = vpack.c.bf16 %v1373, %v1368
      %v1479 = vpack.c.bf16 %v1379, %v1374
      %v1480 = vpack.c.bf16 %v1380, %v1375
      %v1481 = vpack.c.bf16 %v1381, %v1376
      %v1482 = vpack.c.bf16 %v1382, %v1377
      %v1483 = vpack.c.bf16 %v1383, %v1378
      %v1484 = vpack.c.bf16 %v1389, %v1384
      %v1485 = vpack.c.bf16 %v1390, %v1385
      %v1486 = vpack.c.bf16 %v1391, %v1386
      %v1487 = vpack.c.bf16 %v1392, %v1387
      %v1488 = vpack.c.bf16 %v1393, %v1388
      %v1489 = vpack.c.bf16 %v1399, %v1394
      %v1490 = vpack.c.bf16 %v1400, %v1395
      %v1491 = vpack.c.bf16 %v1401, %v1396
      %v1492 = vpack.c.bf16 %v1402, %v1397
      %v1493 = vpack.c.bf16 %v1403, %v1398
      %v1494 = vpack.c.bf16 %v1409, %v1404
      %v1495 = vpack.c.bf16 %v1410, %v1405
      %v1496 = vpack.c.bf16 %v1411, %v1406
      %v1497 = vpack.c.bf16 %v1412, %v1407
      %v1498 = vpack.c.bf16 %v1413, %v1408
      %v1499 = vpack.c.bf16 %v1419, %v1414
      %v1500 = vpack.c.bf16 %v1420, %v1415
      %v1501 = vpack.c.bf16 %v1421, %v1416
      %v1502 = vpack.c.bf16 %v1422, %v1417
      %v1503 = vpack.c.bf16 %v1423, %v1418
      %v1504 = vld [vmem:[%s1] sm:$0xf]
      %v1505 = vld [vmem:[%s1 + $0x4] sm:$0xf]
      %v1506 = vld [vmem:[%s1 + $0x8] sm:$0xf]
      %v1507 = vld [vmem:[%s1 + $0xc] sm:$0xf]
      %v1508 = vld [vmem:[%s1 + $0x10] sm:$0xf]
      %v1509 = vld [vmem:[%s1 + $0x14] sm:$0xf]
      %v1510 = vld [vmem:[%s1 + $0x18] sm:$0xf]
      %v1511 = vld [vmem:[%s1 + $0x1c] sm:$0xf]
      %v1512 = vld [vmem:[%s1 + $0x20] sm:$0xf]
      %v1513 = vld [vmem:[%s1 + $0x24] sm:$0xf]
      %v1514 = vld [vmem:[%s1 + $0x28] sm:$0xf]
      %v1515 = vld [vmem:[%s1 + $0x2c] sm:$0xf]
      %v1516 = vld [vmem:[%s1 + $0x30] sm:$0xf]
      %v1517 = vld [vmem:[%s1 + $0x34] sm:$0xf]
      %v1518 = vld [vmem:[%s1 + $0x38] sm:$0xf]
      %v1519 = vld [vmem:[%s1 + $0x3c] sm:$0xf]
      %v1520 = vld [vmem:[%s1 + $0x40] sm:$0xf]
      %v1521 = vld [vmem:[%s1 + $0x44] sm:$0xf]
      %v1522 = vld [vmem:[%s1 + $0x48] sm:$0xf]
      %v1523 = vld [vmem:[%s1 + $0x4c] sm:$0xf]
      %v1524 = vld [vmem:[%s1 + $0x50] sm:$0xf]
      %v1525 = vld [vmem:[%s1 + $0x54] sm:$0xf]
      %v1526 = vld [vmem:[%s1 + $0x58] sm:$0xf]
      %v1527 = vld [vmem:[%s1 + $0x5c] sm:$0xf]
      %v1528 = vld [vmem:[%s1 + $0x60] sm:$0xf]
      %v1529 = vld [vmem:[%s1 + $0x64] sm:$0xf]
      %v1530 = vld [vmem:[%s1 + $0x68] sm:$0xf]
      %v1531 = vld [vmem:[%s1 + $0x6c] sm:$0xf]
      %v1532 = vld [vmem:[%s1 + $0x70] sm:$0xf]
      %v1533 = vld [vmem:[%s1 + $0x74] sm:$0xf]
      %v1534 = vld [vmem:[%s1 + $0x78] sm:$0xf]
      %v1535 = vld [vmem:[%s1 + $0x7c] sm:$0xf]
      %v1536 = vld [vmem:[%s1 + $0x80] sm:$0xf]
      %v1537 = vld [vmem:[%s1 + $0x84] sm:$0xf]
      %v1538 = vld [vmem:[%s1 + $0x88] sm:$0xf]
      %v1539 = vld [vmem:[%s1 + $0x8c] sm:$0xf]
      %v1540 = vld [vmem:[%s1 + $0x90] sm:$0xf]
      %v1541 = vld [vmem:[%s1 + $0x94] sm:$0xf]
      %v1542 = vld [vmem:[%s1 + $0x98] sm:$0xf]
      %v1543 = vld [vmem:[%s1 + $0x9c] sm:$0xf]
      %v1544 = vld [vmem:[%s1 + $0xa0] sm:$0xf]
      %v1545 = vld [vmem:[%s1 + $0xa4] sm:$0xf]
      %v1546 = vld [vmem:[%s1 + $0xa8] sm:$0xf]
      %v1547 = vld [vmem:[%s1 + $0xac] sm:$0xf]
      %v1548 = vld [vmem:[%s1 + $0xb0] sm:$0xf]
      %v1549 = vld [vmem:[%s1 + $0xb4] sm:$0xf]
      %v1550 = vld [vmem:[%s1 + $0xb8] sm:$0xf]
      %v1551 = vld [vmem:[%s1 + $0xbc] sm:$0xf]
      %v1552 = vld [vmem:[%s1 + $0xc0] sm:$0xf]
      %v1553 = vld [vmem:[%s1 + $0xc4] sm:$0xf]
      %v1554 = vld [vmem:[%s1 + $0xc8] sm:$0xf]
      %v1555 = vld [vmem:[%s1 + $0xcc] sm:$0xf]
      %v1556 = vld [vmem:[%s1 + $0xd0] sm:$0xf]
      %v1557 = vld [vmem:[%s1 + $0xd4] sm:$0xf]
      %v1558 = vld [vmem:[%s1 + $0xd8] sm:$0xf]
      %v1559 = vld [vmem:[%s1 + $0xdc] sm:$0xf]
      %v1560 = vld [vmem:[%s1 + $0xe0] sm:$0xf]
      %v1561 = vld [vmem:[%s1 + $0xe4] sm:$0xf]
      %v1562 = vld [vmem:[%s1 + $0xe8] sm:$0xf]
      %v1563 = vld [vmem:[%s1 + $0xec] sm:$0xf]
      %v1564 = vld [vmem:[%s1 + $0xf0] sm:$0xf]
      %v1565 = vld [vmem:[%s1 + $0xf4] sm:$0xf]
      %v1566 = vld [vmem:[%s1 + $0xf8] sm:$0xf]
      %v1567 = vld [vmem:[%s1 + $0xfc] sm:$0xf]
      %v1568 = vld [vmem:[%s1 + $0x100] sm:$0xf]
      %v1569 = vld [vmem:[%s1 + $0x104] sm:$0xf]
      %v1570 = vld [vmem:[%s1 + $0x108] sm:$0xf]
      %v1571 = vld [vmem:[%s1 + $0x10c] sm:$0xf]
      %v1572 = vld [vmem:[%s1 + $0x110] sm:$0xf]
      %v1573 = vld [vmem:[%s1 + $0x114] sm:$0xf]
      %v1574 = vld [vmem:[%s1 + $0x118] sm:$0xf]
      %v1575 = vld [vmem:[%s1 + $0x11c] sm:$0xf]
      %v1576 = vld [vmem:[%s2] sm:$0x1]
      %v1578 = vlaneseq
      %v1579 = vshrl.u32 %v1578, 7
      %v1580 = vsub.s32 0, %v1579
      %v1581 = vrot.slane %v1576, %v1580
      %v1655 = vunpack.c.l.b16 %v1504
      %v1656 = vunpack.c.l.b16 %v1505
      %v1657 = vunpack.c.l.b16 %v1506
      %v1658 = vunpack.c.l.b16 %v1507
      %v1659 = vunpack.c.l.b16 %v1508
      %v1660 = vunpack.c.l.b16 %v1509
      %v1661 = vunpack.c.l.b16 %v1510
      %v1662 = vunpack.c.l.b16 %v1511
      %v1663 = vunpack.c.l.b16 %v1512
      %v1664 = vunpack.c.l.b16 %v1513
      %v1665 = vunpack.c.l.b16 %v1514
      %v1666 = vunpack.c.l.b16 %v1515
      %v1667 = vunpack.c.l.b16 %v1516
      %v1668 = vunpack.c.l.b16 %v1517
      %v1669 = vunpack.c.l.b16 %v1518
      %v1670 = vunpack.c.l.b16 %v1519
      %v1671 = vunpack.c.l.b16 %v1520
      %v1672 = vunpack.c.l.b16 %v1521
      %v1673 = vunpack.c.l.b16 %v1522
      %v1674 = vunpack.c.l.b16 %v1523
      %v1675 = vunpack.c.l.b16 %v1524
      %v1676 = vunpack.c.l.b16 %v1525
      %v1677 = vunpack.c.l.b16 %v1526
      %v1678 = vunpack.c.l.b16 %v1527
      %v1679 = vunpack.c.l.b16 %v1528
      %v1680 = vunpack.c.l.b16 %v1529
      %v1681 = vunpack.c.l.b16 %v1530
      %v1682 = vunpack.c.l.b16 %v1531
      %v1683 = vunpack.c.l.b16 %v1532
      %v1684 = vunpack.c.l.b16 %v1533
      %v1685 = vunpack.c.l.b16 %v1534
      %v1686 = vunpack.c.l.b16 %v1535
      %v1687 = vunpack.c.l.b16 %v1536
      %v1688 = vunpack.c.l.b16 %v1537
      %v1689 = vunpack.c.l.b16 %v1538
      %v1690 = vunpack.c.l.b16 %v1539
      %v1691 = vunpack.c.l.b16 %v1540
      %v1692 = vunpack.c.l.b16 %v1541
      %v1693 = vunpack.c.l.b16 %v1542
      %v1694 = vunpack.c.l.b16 %v1543
      %v1695 = vunpack.c.l.b16 %v1544
      %v1696 = vunpack.c.l.b16 %v1545
      %v1697 = vunpack.c.l.b16 %v1546
      %v1698 = vunpack.c.l.b16 %v1547
      %v1699 = vunpack.c.l.b16 %v1548
      %v1700 = vunpack.c.l.b16 %v1549
      %v1701 = vunpack.c.l.b16 %v1550
      %v1702 = vunpack.c.l.b16 %v1551
      %v1703 = vunpack.c.l.b16 %v1552
      %v1704 = vunpack.c.l.b16 %v1553
      %v1705 = vunpack.c.l.b16 %v1554
      %v1706 = vunpack.c.l.b16 %v1555
      %v1707 = vunpack.c.l.b16 %v1556
      %v1708 = vunpack.c.l.b16 %v1557
      %v1709 = vunpack.c.l.b16 %v1558
      %v1710 = vunpack.c.l.b16 %v1559
      %v1711 = vunpack.c.l.b16 %v1560
      %v1712 = vunpack.c.l.b16 %v1561
      %v1713 = vunpack.c.l.b16 %v1562
      %v1714 = vunpack.c.l.b16 %v1563
      %v1715 = vunpack.c.l.b16 %v1564
      %v1716 = vunpack.c.l.b16 %v1565
      %v1717 = vunpack.c.l.b16 %v1566
      %v1718 = vunpack.c.l.b16 %v1567
      %v1719 = vunpack.c.l.b16 %v1568
      %v1720 = vunpack.c.l.b16 %v1569
      %v1721 = vunpack.c.l.b16 %v1570
      %v1722 = vunpack.c.l.b16 %v1571
      %v1723 = vunpack.c.l.b16 %v1572
      %v1724 = vunpack.c.l.b16 %v1573
      %v1725 = vunpack.c.l.b16 %v1574
      %v1726 = vunpack.c.l.b16 %v1575
      %v1727 = vpack.c.b16 %v1656, %v1655
      %v1728 = vpack.c.b16 %v1658, %v1657
      %v1729 = vpack.c.b16 %v1660, %v1659
      %v1730 = vpack.c.b16 %v1662, %v1661
      %v1731 = vpack.c.b16 %v1664, %v1663
      %v1732 = vpack.c.b16 %v1666, %v1665
      %v1733 = vpack.c.b16 %v1668, %v1667
      %v1734 = vpack.c.b16 %v1670, %v1669
      %v1735 = vpack.c.b16 %v1672, %v1671
      %v1736 = vpack.c.b16 %v1674, %v1673
      %v1737 = vpack.c.b16 %v1676, %v1675
      %v1738 = vpack.c.b16 %v1678, %v1677
      %v1739 = vpack.c.b16 %v1680, %v1679
      %v1740 = vpack.c.b16 %v1682, %v1681
      %v1741 = vpack.c.b16 %v1684, %v1683
      %v1742 = vpack.c.b16 %v1686, %v1685
      %v1743 = vpack.c.b16 %v1688, %v1687
      %v1744 = vpack.c.b16 %v1690, %v1689
      %v1745 = vpack.c.b16 %v1692, %v1691
      %v1746 = vpack.c.b16 %v1694, %v1693
      %v1747 = vpack.c.b16 %v1696, %v1695
      %v1748 = vpack.c.b16 %v1698, %v1697
      %v1749 = vpack.c.b16 %v1700, %v1699
      %v1750 = vpack.c.b16 %v1702, %v1701
      %v1751 = vpack.c.b16 %v1704, %v1703
      %v1752 = vpack.c.b16 %v1706, %v1705
      %v1753 = vpack.c.b16 %v1708, %v1707
      %v1754 = vpack.c.b16 %v1710, %v1709
      %v1755 = vpack.c.b16 %v1712, %v1711
      %v1756 = vpack.c.b16 %v1714, %v1713
      %v1757 = vpack.c.b16 %v1716, %v1715
      %v1758 = vpack.c.b16 %v1718, %v1717
      %v1759 = vpack.c.b16 %v1720, %v1719
      %v1760 = vpack.c.b16 %v1722, %v1721
      %v1761 = vpack.c.b16 %v1724, %v1723
      %v1762 = vpack.c.b16 %v1726, %v1725
      %v1800 = vsel %vm204, %v1428, 0
      %v1803 = vsel %vm204, %v1433, 0
      %v1806 = vsel %vm204, %v1438, 0
      %v1809 = vsel %vm204, %v1443, 0
      %v1812 = vsel %vm204, %v1448, 0
      %v1815 = vsel %vm204, %v1453, 0
      %v1818 = vsel %vm204, %v1458, 0
      %v1821 = vsel %vm204, %v1463, 0
      %v1824 = vsel %vm204, %v1468, 0
      %v1827 = vsel %vm204, %v1473, 0
      %v1830 = vsel %vm204, %v1478, 0
      %v1833 = vsel %vm204, %v1483, 0
      %v1836 = vsel %vm204, %v1488, 0
      %v1839 = vsel %vm204, %v1493, 0
      %v1842 = vsel %vm204, %v1498, 0
      %v1845 = vsel %vm204, %v1503, 0
      %1847 = vmatprep.subr.bf16.mxu0 0
      %1848 = vmatpush1.bf16.msra.mxu0 %v1727
      %1849 = vmatprep.subr.bf16.mxu0 0
      %1850 = vmatpush1.bf16.msra.mxu0 %v1728
      %1851 = vmatprep.subr.bf16.mxu0 0
      %1852 = vmatpush1.bf16.msra.mxu0 %v1729
      %1853 = vmatprep.subr.bf16.mxu0 0
      %1854 = vmatpush1.bf16.msra.mxu0 %v1730
      %1855 = vmatprep.subr.bf16.mxu0 0
      %1856 = vmatpush1.bf16.msra.mxu0 %v1731
      %1857 = vmatprep.subr.bf16.mxu0 0
      %1858 = vmatpush1.bf16.msra.mxu0 %v1732
      %1859 = vmatprep.subr.bf16.mxu0 0
      %1860 = vmatpush1.bf16.msra.mxu0 %v1733
      %1861 = vmatprep.subr.bf16.mxu0 0
      %1862 = vmatpush1.bf16.msra.mxu0 %v1734
      %1863 = vmatprep.subr.bf16.mxu0 0
      %1864 = vmatpush1.bf16.msra.mxu0 %v1735
      %1865 = vmatprep.subr.bf16.mxu0 0
      %1866 = vmatpush1.bf16.msra.mxu0 %v1736
      %1867 = vmatprep.subr.bf16.mxu0 0
      %1868 = vmatpush1.bf16.msra.mxu0 %v1737
      %1869 = vmatprep.subr.bf16.mxu0 0
      %1870 = vmatpush1.bf16.msra.mxu0 %v1738
      %1871 = vmatprep.subr.bf16.mxu0 0
      %1872 = vmatpush1.bf16.msra.mxu0 %v1739
      %1873 = vmatprep.subr.bf16.mxu0 0
      %1874 = vmatpush1.bf16.msra.mxu0 %v1740
      %1875 = vmatprep.subr.bf16.mxu0 0
      %1876 = vmatpush1.bf16.msra.mxu0 %v1741
      %1877 = vmatprep.subr.bf16.mxu0 0
      %1878 = vmatpush1.bf16.msra.mxu0 %v1742
      %1879 = vmatprep.mubr.bf16.mxu0 %v1425
      %1880 = vmatmul.mubr.bf16.gmra.mrb[0].mxu0 %v1424
      %v1881 = vpop.f32.mrb[0].mxu0
      %v1882 = vadd.f32 %v1581, %v1881
      %v1883 = vpop.f32.mrb[0].mxu0
      %v1884 = vpop.f32.mrb[0].mxu0
      %v1885 = vadd.f32 %v1581, %v1884
      %v1886 = vpop.f32.mrb[0].mxu0
      %1887 = vmatprep.mubr.bf16.mxu0 %v1430
      %1888 = vmatmul.mubr.bf16.gmra.mrb[0].mxu0 %v1429
      %v1889 = vpop.f32.mrb[0].mxu0
      %v1890 = vadd.f32 %v1581, %v1889
      %v1891 = vpop.f32.mrb[0].mxu0
      %v1892 = vpop.f32.mrb[0].mxu0
      %v1893 = vadd.f32 %v1581, %v1892
      %v1894 = vpop.f32.mrb[0].mxu0
      %1895 = vmatprep.mubr.bf16.mxu0 %v1435
      %1896 = vmatmul.mubr.bf16.gmra.mrb[0].mxu0 %v1434
      %v1897 = vpop.f32.mrb[0].mxu0
      %v1898 = vadd.f32 %v1581, %v1897
      %v1899 = vpop.f32.mrb[0].mxu0
      %v1900 = vpop.f32.mrb[0].mxu0
      %v1901 = vadd.f32 %v1581, %v1900
      %v1902 = vpop.f32.mrb[0].mxu0
      %1903 = vmatprep.mubr.bf16.mxu0 %v1440
      %1904 = vmatmul.mubr.bf16.gmra.mrb[0].mxu0 %v1439
      %v1905 = vpop.f32.mrb[0].mxu0
      %v1906 = vadd.f32 %v1581, %v1905
      %v1907 = vpop.f32.mrb[0].mxu0
      %v1908 = vpop.f32.mrb[0].mxu0
      %v1909 = vadd.f32 %v1581, %v1908
      %v1910 = vpop.f32.mrb[0].mxu0
      %1911 = vmatprep.mubr.bf16.mxu0 %v1445
      %1912 = vmatmul.mubr.bf16.gmra.mrb[0].mxu0 %v1444
      %v1913 = vpop.f32.mrb[0].mxu0
      %v1914 = vadd.f32 %v1581, %v1913
      %v1915 = vpop.f32.mrb[0].mxu0
      %v1916 = vpop.f32.mrb[0].mxu0
      %v1917 = vadd.f32 %v1581, %v1916
      %v1918 = vpop.f32.mrb[0].mxu0
      %1919 = vmatprep.mubr.bf16.mxu0 %v1450
      %1920 = vmatmul.mubr.bf16.gmra.mrb[0].mxu0 %v1449
      %v1921 = vpop.f32.mrb[0].mxu0
      %v1922 = vadd.f32 %v1581, %v1921
      %v1923 = vpop.f32.mrb[0].mxu0
      %v1924 = vpop.f32.mrb[0].mxu0
      %v1925 = vadd.f32 %v1581, %v1924
      %v1926 = vpop.f32.mrb[0].mxu0
      %1927 = vmatprep.mubr.bf16.mxu0 %v1455
      %1928 = vmatmul.mubr.bf16.gmra.mrb[0].mxu0 %v1454
      %v1929 = vpop.f32.mrb[0].mxu0
      %v1930 = vadd.f32 %v1581, %v1929
      %v1931 = vpop.f32.mrb[0].mxu0
      %v1932 = vpop.f32.mrb[0].mxu0
      %v1933 = vadd.f32 %v1581, %v1932
      %v1934 = vpop.f32.mrb[0].mxu0
      %1935 = vmatprep.mubr.bf16.mxu0 %v1460
      %1936 = vmatmul.mubr.bf16.gmra.mrb[0].mxu0 %v1459
      %v1937 = vpop.f32.mrb[0].mxu0
      %v1938 = vadd.f32 %v1581, %v1937
      %v1939 = vpop.f32.mrb[0].mxu0
      %v1940 = vpop.f32.mrb[0].mxu0
      %v1941 = vadd.f32 %v1581, %v1940
      %v1942 = vpop.f32.mrb[0].mxu0
      %1943 = vmatprep.mubr.bf16.mxu0 %v1465
      %1944 = vmatmul.mubr.bf16.gmra.mrb[0].mxu0 %v1464
      %v1945 = vpop.f32.mrb[0].mxu0
      %v1946 = vadd.f32 %v1581, %v1945
      %v1947 = vpop.f32.mrb[0].mxu0
      %v1948 = vpop.f32.mrb[0].mxu0
      %v1949 = vadd.f32 %v1581, %v1948
      %v1950 = vpop.f32.mrb[0].mxu0
      %1951 = vmatprep.mubr.bf16.mxu0 %v1470
      %1952 = vmatmul.mubr.bf16.gmra.mrb[0].mxu0 %v1469
      %v1953 = vpop.f32.mrb[0].mxu0
      %v1954 = vadd.f32 %v1581, %v1953
      %v1955 = vpop.f32.mrb[0].mxu0
      %v1956 = vpop.f32.mrb[0].mxu0
      %v1957 = vadd.f32 %v1581, %v1956
      %v1958 = vpop.f32.mrb[0].mxu0
      %1959 = vmatprep.mubr.bf16.mxu0 %v1475
      %1960 = vmatmul.mubr.bf16.gmra.mrb[0].mxu0 %v1474
      %v1961 = vpop.f32.mrb[0].mxu0
      %v1962 = vadd.f32 %v1581, %v1961
      %v1963 = vpop.f32.mrb[0].mxu0
      %v1964 = vpop.f32.mrb[0].mxu0
      %v1965 = vadd.f32 %v1581, %v1964
      %v1966 = vpop.f32.mrb[0].mxu0
      %1967 = vmatprep.mubr.bf16.mxu0 %v1480
      %1968 = vmatmul.mubr.bf16.gmra.mrb[0].mxu0 %v1479
      %v1969 = vpop.f32.mrb[0].mxu0
      %v1970 = vadd.f32 %v1581, %v1969
      %v1971 = vpop.f32.mrb[0].mxu0
      %v1972 = vpop.f32.mrb[0].mxu0
      %v1973 = vadd.f32 %v1581, %v1972
      %v1974 = vpop.f32.mrb[0].mxu0
      %1975 = vmatprep.mubr.bf16.mxu0 %v1485
      %1976 = vmatmul.mubr.bf16.gmra.mrb[0].mxu0 %v1484
      %v1977 = vpop.f32.mrb[0].mxu0
      %v1978 = vadd.f32 %v1581, %v1977
      %v1979 = vpop.f32.mrb[0].mxu0
      %v1980 = vpop.f32.mrb[0].mxu0
      %v1981 = vadd.f32 %v1581, %v1980
      %v1982 = vpop.f32.mrb[0].mxu0
      %1983 = vmatprep.mubr.bf16.mxu0 %v1490
      %1984 = vmatmul.mubr.bf16.gmra.mrb[0].mxu0 %v1489
      %v1985 = vpop.f32.mrb[0].mxu0
      %v1986 = vadd.f32 %v1581, %v1985
      %v1987 = vpop.f32.mrb[0].mxu0
      %v1988 = vpop.f32.mrb[0].mxu0
      %v1989 = vadd.f32 %v1581, %v1988
      %v1990 = vpop.f32.mrb[0].mxu0
      %1991 = vmatprep.mubr.bf16.mxu0 %v1495
      %1992 = vmatmul.mubr.bf16.gmra.mrb[0].mxu0 %v1494
      %v1993 = vpop.f32.mrb[0].mxu0
      %v1994 = vadd.f32 %v1581, %v1993
      %v1995 = vpop.f32.mrb[0].mxu0
      %v1996 = vpop.f32.mrb[0].mxu0
      %v1997 = vadd.f32 %v1581, %v1996
      %v1998 = vpop.f32.mrb[0].mxu0
      %1999 = vmatprep.mubr.bf16.mxu0 %v1500
      %2000 = vmatmul.mubr.bf16.gmra.mrb[0].mxu0 %v1499
      %v2001 = vpop.f32.mrb[0].mxu0
      %v2002 = vadd.f32 %v1581, %v2001
      %v2003 = vpop.f32.mrb[0].mxu0
      %v2004 = vpop.f32.mrb[0].mxu0
      %v2005 = vadd.f32 %v1581, %v2004
      %v2006 = vpop.f32.mrb[0].mxu0
      %2007 = vdwg.mxu0
      %2008 = vmatprep.subr.bf16.mxu0 0
      %2009 = vmatpush1.bf16.msra.mxu0 %v1743
      %2010 = vmatprep.subr.bf16.mxu0 0
      %2011 = vmatpush1.bf16.msra.mxu0 %v1744
      %2012 = vmatprep.subr.bf16.mxu0 0
      %2013 = vmatpush1.bf16.msra.mxu0 %v1745
      %2014 = vmatprep.subr.bf16.mxu0 0
      %2015 = vmatpush1.bf16.msra.mxu0 %v1746
      %2016 = vmatprep.subr.bf16.mxu0 0
      %2017 = vmatpush1.bf16.msra.mxu0 %v1747
      %2018 = vmatprep.subr.bf16.mxu0 0
      %2019 = vmatpush1.bf16.msra.mxu0 %v1748
      %2020 = vmatprep.subr.bf16.mxu0 0
      %2021 = vmatpush1.bf16.msra.mxu0 %v1749
      %2022 = vmatprep.subr.bf16.mxu0 0
      %2023 = vmatpush1.bf16.msra.mxu0 %v1750
      %2024 = vmatprep.subr.bf16.mxu0 0
      %2025 = vmatpush1.bf16.msra.mxu0 %v1751
      %2026 = vmatprep.subr.bf16.mxu0 0
      %2027 = vmatpush1.bf16.msra.mxu0 %v1752
      %2028 = vmatprep.subr.bf16.mxu0 0
      %2029 = vmatpush1.bf16.msra.mxu0 %v1753
      %2030 = vmatprep.subr.bf16.mxu0 0
      %2031 = vmatpush1.bf16.msra.mxu0 %v1754
      %2032 = vmatprep.subr.bf16.mxu0 0
      %2033 = vmatpush1.bf16.msra.mxu0 %v1755
      %2034 = vmatprep.subr.bf16.mxu0 0
      %2035 = vmatpush1.bf16.msra.mxu0 %v1756
      %2036 = vmatprep.subr.bf16.mxu0 0
      %2037 = vmatpush1.bf16.msra.mxu0 %v1757
      %2038 = vmatprep.subr.bf16.mxu0 0
      %2039 = vmatpush1.bf16.msra.mxu0 %v1758
      %2040 = vmatprep.mubr.bf16.mxu0 %v1427
      %2041 = vmatmul.mubr.bf16.gmra.mrb[0].mxu0 %v1426
      %v2042 = vpop.f32.mrb[0].mxu0
      %v2043 = vadd.f32 %v1882, %v2042
      %v2044 = vpop.f32.mrb[0].mxu0
      %v2045 = vpop.f32.mrb[0].mxu0
      %v2046 = vadd.f32 %v1885, %v2045
      %v2047 = vpop.f32.mrb[0].mxu0
      %2048 = vmatprep.mubr.bf16.mxu0 %v1432
      %2049 = vmatmul.mubr.bf16.gmra.mrb[0].mxu0 %v1431
      %v2050 = vpop.f32.mrb[0].mxu0
      %v2051 = vadd.f32 %v1890, %v2050
      %v2052 = vpop.f32.mrb[0].mxu0
      %v2053 = vpop.f32.mrb[0].mxu0
      %v2054 = vadd.f32 %v1893, %v2053
      %v2055 = vpop.f32.mrb[0].mxu0
      %2056 = vmatprep.mubr.bf16.mxu0 %v1437
      %2057 = vmatmul.mubr.bf16.gmra.mrb[0].mxu0 %v1436
      %v2058 = vpop.f32.mrb[0].mxu0
      %v2059 = vadd.f32 %v1898, %v2058
      %v2060 = vpop.f32.mrb[0].mxu0
      %v2061 = vpop.f32.mrb[0].mxu0
      %v2062 = vadd.f32 %v1901, %v2061
      %v2063 = vpop.f32.mrb[0].mxu0
      %2064 = vmatprep.mubr.bf16.mxu0 %v1442
      %2065 = vmatmul.mubr.bf16.gmra.mrb[0].mxu0 %v1441
      %v2066 = vpop.f32.mrb[0].mxu0
      %v2067 = vadd.f32 %v1906, %v2066
      %v2068 = vpop.f32.mrb[0].mxu0
      %v2069 = vpop.f32.mrb[0].mxu0
      %v2070 = vadd.f32 %v1909, %v2069
      %v2071 = vpop.f32.mrb[0].mxu0
      %2072 = vmatprep.mubr.bf16.mxu0 %v1447
      %2073 = vmatmul.mubr.bf16.gmra.mrb[0].mxu0 %v1446
      %v2074 = vpop.f32.mrb[0].mxu0
      %v2075 = vadd.f32 %v1914, %v2074
      %v2076 = vpop.f32.mrb[0].mxu0
      %v2077 = vpop.f32.mrb[0].mxu0
      %v2078 = vadd.f32 %v1917, %v2077
      %v2079 = vpop.f32.mrb[0].mxu0
      %2080 = vmatprep.mubr.bf16.mxu0 %v1452
      %2081 = vmatmul.mubr.bf16.gmra.mrb[0].mxu0 %v1451
      %v2082 = vpop.f32.mrb[0].mxu0
      %v2083 = vadd.f32 %v1922, %v2082
      %v2084 = vpop.f32.mrb[0].mxu0
      %v2085 = vpop.f32.mrb[0].mxu0
      %v2086 = vadd.f32 %v1925, %v2085
      %v2087 = vpop.f32.mrb[0].mxu0
      %2088 = vmatprep.mubr.bf16.mxu0 %v1457
      %2089 = vmatmul.mubr.bf16.gmra.mrb[0].mxu0 %v1456
      %v2090 = vpop.f32.mrb[0].mxu0
      %v2091 = vadd.f32 %v1930, %v2090
      %v2092 = vpop.f32.mrb[0].mxu0
      %v2093 = vpop.f32.mrb[0].mxu0
      %v2094 = vadd.f32 %v1933, %v2093
      %v2095 = vpop.f32.mrb[0].mxu0
      %2096 = vmatprep.mubr.bf16.mxu0 %v1462
      %2097 = vmatmul.mubr.bf16.gmra.mrb[0].mxu0 %v1461
      %v2098 = vpop.f32.mrb[0].mxu0
      %v2099 = vadd.f32 %v1938, %v2098
      %v2100 = vpop.f32.mrb[0].mxu0
      %v2101 = vpop.f32.mrb[0].mxu0
      %v2102 = vadd.f32 %v1941, %v2101
      %v2103 = vpop.f32.mrb[0].mxu0
      %2104 = vmatprep.mubr.bf16.mxu0 %v1467
      %2105 = vmatmul.mubr.bf16.gmra.mrb[0].mxu0 %v1466
      %v2106 = vpop.f32.mrb[0].mxu0
      %v2107 = vadd.f32 %v1946, %v2106
      %v2108 = vpop.f32.mrb[0].mxu0
      %v2109 = vpop.f32.mrb[0].mxu0
      %v2110 = vadd.f32 %v1949, %v2109
      %v2111 = vpop.f32.mrb[0].mxu0
      %2112 = vmatprep.mubr.bf16.mxu0 %v1472
      %2113 = vmatmul.mubr.bf16.gmra.mrb[0].mxu0 %v1471
      %v2114 = vpop.f32.mrb[0].mxu0
      %v2115 = vadd.f32 %v1954, %v2114
      %v2116 = vpop.f32.mrb[0].mxu0
      %v2117 = vpop.f32.mrb[0].mxu0
      %v2118 = vadd.f32 %v1957, %v2117
      %v2119 = vpop.f32.mrb[0].mxu0
      %2120 = vmatprep.mubr.bf16.mxu0 %v1477
      %2121 = vmatmul.mubr.bf16.gmra.mrb[0].mxu0 %v1476
      %v2122 = vpop.f32.mrb[0].mxu0
      %v2123 = vadd.f32 %v1962, %v2122
      %v2124 = vpop.f32.mrb[0].mxu0
      %v2125 = vpop.f32.mrb[0].mxu0
      %v2126 = vadd.f32 %v1965, %v2125
      %v2127 = vpop.f32.mrb[0].mxu0
      %2128 = vmatprep.mubr.bf16.mxu0 %v1482
      %2129 = vmatmul.mubr.bf16.gmra.mrb[0].mxu0 %v1481
      %v2130 = vpop.f32.mrb[0].mxu0
      %v2131 = vadd.f32 %v1970, %v2130
      %v2132 = vpop.f32.mrb[0].mxu0
      %v2133 = vpop.f32.mrb[0].mxu0
      %v2134 = vadd.f32 %v1973, %v2133
      %v2135 = vpop.f32.mrb[0].mxu0
      %2136 = vmatprep.mubr.bf16.mxu0 %v1487
      %2137 = vmatmul.mubr.bf16.gmra.mrb[0].mxu0 %v1486
      %v2138 = vpop.f32.mrb[0].mxu0
      %v2139 = vadd.f32 %v1978, %v2138
      %v2140 = vpop.f32.mrb[0].mxu0
      %v2141 = vpop.f32.mrb[0].mxu0
      %v2142 = vadd.f32 %v1981, %v2141
      %v2143 = vpop.f32.mrb[0].mxu0
      %2144 = vmatprep.mubr.bf16.mxu0 %v1492
      %2145 = vmatmul.mubr.bf16.gmra.mrb[0].mxu0 %v1491
      %v2146 = vpop.f32.mrb[0].mxu0
      %v2147 = vadd.f32 %v1986, %v2146
      %v2148 = vpop.f32.mrb[0].mxu0
      %v2149 = vpop.f32.mrb[0].mxu0
      %v2150 = vadd.f32 %v1989, %v2149
      %v2151 = vpop.f32.mrb[0].mxu0
      %2152 = vmatprep.mubr.bf16.mxu0 %v1497
      %2153 = vmatmul.mubr.bf16.gmra.mrb[0].mxu0 %v1496
      %v2154 = vpop.f32.mrb[0].mxu0
      %v2155 = vadd.f32 %v1994, %v2154
      %v2156 = vpop.f32.mrb[0].mxu0
      %v2157 = vpop.f32.mrb[0].mxu0
      %v2158 = vadd.f32 %v1997, %v2157
      %v2159 = vpop.f32.mrb[0].mxu0
      %2160 = vmatprep.mubr.bf16.mxu0 %v1502
      %2161 = vmatmul.mubr.bf16.gmra.mrb[0].mxu0 %v1501
      %v2162 = vpop.f32.mrb[0].mxu0
      %v2163 = vadd.f32 %v2002, %v2162
      %v2164 = vpop.f32.mrb[0].mxu0
      %v2165 = vpop.f32.mrb[0].mxu0
      %v2166 = vadd.f32 %v2005, %v2165
      %v2167 = vpop.f32.mrb[0].mxu0
      %2168 = vdwg.mxu0
      %2169 = vmatprep.subr.bf16.mxu0 0
      %2170 = vmatpush1.bf16.msra.mxu0 %v1759
      %2171 = vmatprep.subr.bf16.mxu0 0
      %2172 = vmatpush1.bf16.msra.mxu0 %v1760
      %2173 = vmatprep.subr.bf16.mxu0 0
      %2174 = vmatpush1.bf16.msra.mxu0 %v1761
      %2175 = vmatprep.subr.bf16.mxu0 0
      %2176 = vmatpush1.bf16.msra.mxu0 %v1762
      %2177 = vmatprep.subr.bf16.mxu0 0
      %2178 = vmatpush1.bf16.msra.mxu0 0
      %2179 = vmatprep.subr.bf16.mxu0 0
      %2180 = vmatpush1.bf16.msra.mxu0 0
      %2181 = vmatprep.subr.bf16.mxu0 0
      %2182 = vmatpush1.bf16.msra.mxu0 0
      %2183 = vmatprep.subr.bf16.mxu0 0
      %2184 = vmatpush1.bf16.msra.mxu0 0
      %2185 = vmatprep.subr.bf16.mxu0 0
      %2186 = vmatpush1.bf16.msra.mxu0 0
      %2187 = vmatprep.subr.bf16.mxu0 0
      %2188 = vmatpush1.bf16.msra.mxu0 0
      %2189 = vmatprep.subr.bf16.mxu0 0
      %2190 = vmatpush1.bf16.msra.mxu0 0
      %2191 = vmatprep.subr.bf16.mxu0 0
      %2192 = vmatpush1.bf16.msra.mxu0 0
      %2193 = vmatprep.subr.bf16.mxu0 0
      %2194 = vmatpush1.bf16.msra.mxu0 0
      %2195 = vmatprep.subr.bf16.mxu0 0
      %2196 = vmatpush1.bf16.msra.mxu0 0
      %2197 = vmatprep.subr.bf16.mxu0 0
      %2198 = vmatpush1.bf16.msra.mxu0 0
      %2199 = vmatprep.subr.bf16.mxu0 0
      %2200 = vmatpush1.bf16.msra.mxu0 0
      %2201 = vmatprep.mubr.bf16.mxu0 0
      %2202 = vmatmul.mubr.bf16.gmra.mrb[0].mxu0 %v1800
      %v2203 = vpop.f32.mrb[0].mxu0
      %v2204 = vadd.f32 %v2043, %v2203
      %v2205 = vpop.f32.mrb[0].mxu0
      %v2206 = vpop.f32.mrb[0].mxu0
      %v2207 = vadd.f32 %v2046, %v2206
      %v2208 = vpop.f32.mrb[0].mxu0
      %2209 = vmatprep.mubr.bf16.mxu0 0
      %2210 = vmatmul.mubr.bf16.gmra.mrb[0].mxu0 %v1803
      %v2211 = vpop.f32.mrb[0].mxu0
      %v2212 = vadd.f32 %v2051, %v2211
      %v2213 = vpop.f32.mrb[0].mxu0
      %v2214 = vpop.f32.mrb[0].mxu0
      %v2215 = vadd.f32 %v2054, %v2214
      %v2216 = vpop.f32.mrb[0].mxu0
      %2217 = vmatprep.mubr.bf16.mxu0 0
      %2218 = vmatmul.mubr.bf16.gmra.mrb[0].mxu0 %v1806
      %v2219 = vpop.f32.mrb[0].mxu0
      %v2220 = vadd.f32 %v2059, %v2219
      %v2221 = vpop.f32.mrb[0].mxu0
      %v2222 = vpop.f32.mrb[0].mxu0
      %v2223 = vadd.f32 %v2062, %v2222
      %v2224 = vpop.f32.mrb[0].mxu0
      %2225 = vmatprep.mubr.bf16.mxu0 0
      %2226 = vmatmul.mubr.bf16.gmra.mrb[0].mxu0 %v1809
      %v2227 = vpop.f32.mrb[0].mxu0
      %v2228 = vadd.f32 %v2067, %v2227
      %v2229 = vpop.f32.mrb[0].mxu0
      %v2230 = vpop.f32.mrb[0].mxu0
      %v2231 = vadd.f32 %v2070, %v2230
      %v2232 = vpop.f32.mrb[0].mxu0
      %2233 = vmatprep.mubr.bf16.mxu0 0
      %2234 = vmatmul.mubr.bf16.gmra.mrb[0].mxu0 %v1812
      %v2235 = vpop.f32.mrb[0].mxu0
      %v2236 = vadd.f32 %v2075, %v2235
      %v2237 = vpop.f32.mrb[0].mxu0
      %v2238 = vpop.f32.mrb[0].mxu0
      %v2239 = vadd.f32 %v2078, %v2238
      %v2240 = vpop.f32.mrb[0].mxu0
      %2241 = vmatprep.mubr.bf16.mxu0 0
      %2242 = vmatmul.mubr.bf16.gmra.mrb[0].mxu0 %v1815
      %v2243 = vpop.f32.mrb[0].mxu0
      %v2244 = vadd.f32 %v2083, %v2243
      %v2245 = vpop.f32.mrb[0].mxu0
      %v2246 = vpop.f32.mrb[0].mxu0
      %v2247 = vadd.f32 %v2086, %v2246
      %v2248 = vpop.f32.mrb[0].mxu0
      %2249 = vmatprep.mubr.bf16.mxu0 0
      %2250 = vmatmul.mubr.bf16.gmra.mrb[0].mxu0 %v1818
      %v2251 = vpop.f32.mrb[0].mxu0
      %v2252 = vadd.f32 %v2091, %v2251
      %v2253 = vpop.f32.mrb[0].mxu0
      %v2254 = vpop.f32.mrb[0].mxu0
      %v2255 = vadd.f32 %v2094, %v2254
      %v2256 = vpop.f32.mrb[0].mxu0
      %2257 = vmatprep.mubr.bf16.mxu0 0
      %2258 = vmatmul.mubr.bf16.gmra.mrb[0].mxu0 %v1821
      %v2259 = vpop.f32.mrb[0].mxu0
      %v2260 = vadd.f32 %v2099, %v2259
      %v2261 = vpop.f32.mrb[0].mxu0
      %v2262 = vpop.f32.mrb[0].mxu0
      %v2263 = vadd.f32 %v2102, %v2262
      %v2264 = vpop.f32.mrb[0].mxu0
      %2265 = vmatprep.mubr.bf16.mxu0 0
      %2266 = vmatmul.mubr.bf16.gmra.mrb[0].mxu0 %v1824
      %v2267 = vpop.f32.mrb[0].mxu0
      %v2268 = vadd.f32 %v2107, %v2267
      %v2269 = vpop.f32.mrb[0].mxu0
      %v2270 = vpop.f32.mrb[0].mxu0
      %v2271 = vadd.f32 %v2110, %v2270
      %v2272 = vpop.f32.mrb[0].mxu0
      %2273 = vmatprep.mubr.bf16.mxu0 0
      %2274 = vmatmul.mubr.bf16.gmra.mrb[0].mxu0 %v1827
      %v2275 = vpop.f32.mrb[0].mxu0
      %v2276 = vadd.f32 %v2115, %v2275
      %v2277 = vpop.f32.mrb[0].mxu0
      %v2278 = vpop.f32.mrb[0].mxu0
      %v2279 = vadd.f32 %v2118, %v2278
      %v2280 = vpop.f32.mrb[0].mxu0
      %2281 = vmatprep.mubr.bf16.mxu0 0
      %2282 = vmatmul.mubr.bf16.gmra.mrb[0].mxu0 %v1830
      %v2283 = vpop.f32.mrb[0].mxu0
      %v2284 = vadd.f32 %v2123, %v2283
      %v2285 = vpop.f32.mrb[0].mxu0
      %v2286 = vpop.f32.mrb[0].mxu0
      %v2287 = vadd.f32 %v2126, %v2286
      %v2288 = vpop.f32.mrb[0].mxu0
      %2289 = vmatprep.mubr.bf16.mxu0 0
      %2290 = vmatmul.mubr.bf16.gmra.mrb[0].mxu0 %v1833
      %v2291 = vpop.f32.mrb[0].mxu0
      %v2292 = vadd.f32 %v2131, %v2291
      %v2293 = vpop.f32.mrb[0].mxu0
      %v2294 = vpop.f32.mrb[0].mxu0
      %v2295 = vadd.f32 %v2134, %v2294
      %v2296 = vpop.f32.mrb[0].mxu0
      %2297 = vmatprep.mubr.bf16.mxu0 0
      %2298 = vmatmul.mubr.bf16.gmra.mrb[0].mxu0 %v1836
      %v2299 = vpop.f32.mrb[0].mxu0
      %v2300 = vadd.f32 %v2139, %v2299
      %v2301 = vpop.f32.mrb[0].mxu0
      %v2302 = vpop.f32.mrb[0].mxu0
      %v2303 = vadd.f32 %v2142, %v2302
      %v2304 = vpop.f32.mrb[0].mxu0
      %2305 = vmatprep.mubr.bf16.mxu0 0
      %2306 = vmatmul.mubr.bf16.gmra.mrb[0].mxu0 %v1839
      %v2307 = vpop.f32.mrb[0].mxu0
      %v2308 = vadd.f32 %v2147, %v2307
      %v2309 = vpop.f32.mrb[0].mxu0
      %v2310 = vpop.f32.mrb[0].mxu0
      %v2311 = vadd.f32 %v2150, %v2310
      %v2312 = vpop.f32.mrb[0].mxu0
      %2313 = vmatprep.mubr.bf16.mxu0 0
      %2314 = vmatmul.mubr.bf16.gmra.mrb[0].mxu0 %v1842
      %v2315 = vpop.f32.mrb[0].mxu0
      %v2316 = vadd.f32 %v2155, %v2315
      %v2317 = vpop.f32.mrb[0].mxu0
      %v2318 = vpop.f32.mrb[0].mxu0
      %v2319 = vadd.f32 %v2158, %v2318
      %v2320 = vpop.f32.mrb[0].mxu0
      %2321 = vmatprep.mubr.bf16.mxu0 0
      %2322 = vmatmul.mubr.bf16.gmra.mrb[0].mxu0 %v1845
      %v2323 = vpop.f32.mrb[0].mxu0
      %v2324 = vadd.f32 %v2163, %v2323
      %v2325 = vpop.f32.mrb[0].mxu0
      %v2326 = vpop.f32.mrb[0].mxu0
      %v2327 = vadd.f32 %v2166, %v2326
      %v2328 = vpop.f32.mrb[0].mxu0
      %2329 = vdwg.mxu0
      %vm2330 = vcmask 64512
      %2331 = vst.msk [vmem:[%s170] sm:$0xff] %vm2330, %v2204
      %2332 = vst.msk [vmem:[%s170 + $0x8] sm:$0xff] %vm2330, %v2207
      %2333 = vst.msk [vmem:[%s170 + $0x10] sm:$0xff] %vm2330, %v2212
      %2334 = vst.msk [vmem:[%s170 + $0x18] sm:$0xff] %vm2330, %v2215
      %2335 = vst.msk [vmem:[%s170 + $0x20] sm:$0xff] %vm2330, %v2220
      %2336 = vst.msk [vmem:[%s170 + $0x28] sm:$0xff] %vm2330, %v2223
      %2337 = vst.msk [vmem:[%s170 + $0x30] sm:$0xff] %vm2330, %v2228
      %2338 = vst.msk [vmem:[%s170 + $0x38] sm:$0xff] %vm2330, %v2231
      %2339 = vst.msk [vmem:[%s170 + $0x40] sm:$0xff] %vm2330, %v2236
      %2340 = vst.msk [vmem:[%s170 + $0x48] sm:$0xff] %vm2330, %v2239
      %2341 = vst.msk [vmem:[%s170 + $0x50] sm:$0xff] %vm2330, %v2244
      %2342 = vst.msk [vmem:[%s170 + $0x58] sm:$0xff] %vm2330, %v2247
      %2343 = vst.msk [vmem:[%s170 + $0x60] sm:$0xff] %vm2330, %v2252
      %2344 = vst.msk [vmem:[%s170 + $0x68] sm:$0xff] %vm2330, %v2255
      %2345 = vst.msk [vmem:[%s170 + $0x70] sm:$0xff] %vm2330, %v2260
      %2346 = vst.msk [vmem:[%s170 + $0x78] sm:$0xff] %vm2330, %v2263
      %2347 = vst.msk [vmem:[%s170 + $0x80] sm:$0xff] %vm2330, %v2268
      %2348 = vst.msk [vmem:[%s170 + $0x88] sm:$0xff] %vm2330, %v2271
      %2349 = vst.msk [vmem:[%s170 + $0x90] sm:$0xff] %vm2330, %v2276
      %2350 = vst.msk [vmem:[%s170 + $0x98] sm:$0xff] %vm2330, %v2279
      %2351 = vst.msk [vmem:[%s170 + $0xa0] sm:$0xff] %vm2330, %v2284
      %2352 = vst.msk [vmem:[%s170 + $0xa8] sm:$0xff] %vm2330, %v2287
      %2353 = vst.msk [vmem:[%s170 + $0xb0] sm:$0xff] %vm2330, %v2292
      %2354 = vst.msk [vmem:[%s170 + $0xb8] sm:$0xff] %vm2330, %v2295
      %2355 = vst.msk [vmem:[%s170 + $0xc0] sm:$0xff] %vm2330, %v2300
      %2356 = vst.msk [vmem:[%s170 + $0xc8] sm:$0xff] %vm2330, %v2303
      %2357 = vst.msk [vmem:[%s170 + $0xd0] sm:$0xff] %vm2330, %v2308
      %2358 = vst.msk [vmem:[%s170 + $0xd8] sm:$0xff] %vm2330, %v2311
      %2359 = vst.msk [vmem:[%s170 + $0xe0] sm:$0xff] %vm2330, %v2316
      %2360 = vst.msk [vmem:[%s170 + $0xe8] sm:$0xff] %vm2330, %v2319
      %2361 = vst.msk [vmem:[%s170 + $0xf0] sm:$0xff] %vm2330, %v2324
      %2362 = vst.msk [vmem:[%s170 + $0xf8] sm:$0xff] %vm2330, %v2327
      %p2363 = scmp.lt.s32.totalorder %s14, 1
      %s2364 = scalar_select %p2363, %s14, 1
      %s2365 = smul.addr %s2364, 32
      %s2366 = smul.addr %s2365, 8
      %s2367 = scalar_lea.vmem %s3, %s2366
      // Predicated region
      $region33: #{tpu_custom_call.1} parent=31 // pred_check
        %p2368 = pneg %p100
      $region34: #{tpu_custom_call.1} parent=31 // pred_check_branch
        %2370 = sbr.rel (%p2368) target = $region36
      $region35: #{tpu_custom_call.1} parent=31 // pred_region
        _
      $region36: #{tpu_custom_call.1} parent=31 // pred_fallthru
        _
    $region32: #{tpu_custom_call.1} parent=5 // pred_fallthru
      _
    %p2371 = scmp.le.s32.totalorder 2, %s9
    // Predicated region
    $region37: #{tpu_custom_call.1} parent=5 // pred_check
      %p2372 = pneg %p2371
    $region38: #{tpu_custom_call.1} parent=5 // pred_check_branch
      %2374 = sbr.rel (%p2372) target = $region40
    $region39: #{tpu_custom_call.1} parent=5 // pred_region
      %s2375 = ssub.s32 %s9, 2
      // Predicated region
      $region41: #{tpu_custom_call.1} parent=39 // pred_check
        %p2376 = pneg %p106
      $region42: #{tpu_custom_call.1} parent=39 // pred_check_branch
        %2378 = sbr.rel (%p2376) target = $region44
      $region43: #{tpu_custom_call.1} parent=39 // pred_region
        %p2379 = scmp.lt.s32.totalorder %s15, 1
        %s2380 = scalar_select %p2379, %s15, 1
        %s2381 = smul.addr %s2380, 32
        %s2382 = smul.addr %s2381, 8
        %s2383 = scalar_lea.vmem %s3, %s2382
      $region44: #{tpu_custom_call.1} parent=39 // pred_fallthru
        _
    $region40: #{tpu_custom_call.1} parent=5 // pred_fallthru
      _
  $region6: #{tpu_custom_call.1} parent=0 // loop_footer
    %s13 = sadd.s32 1, %s9
  $region7: #{tpu_custom_call.1} parent=0 // loop_footer_branch
    %8 = sbr.rel target = $region3
  $region8: #{tpu_custom_call.1} parent=0 // loop_exit
    _

</llo_original>
